<compile_context>
chip_gen: v6e
topology: v6e:2x2x1
jax: 0.10.0
libtpu: 0.0.40
codegen_flags: <defaults>
</compile_context>

<pallas_src>
import functools

import jax
import jax.numpy as jnp
from jax.experimental import pallas as pl
from jax.experimental.pallas import tpu as pltpu


# ------------------------- fused whole-network kernel -------------------------

def _cln_fused_kernel(exit_ref, len_ref,                    # SMEM (scalar prefetch)
                      x_ref, wih_ref, whh_ref, b_ref,       # VMEM inputs (LSTM)
                      w1_ref, b1_ref, w2_ref, b2_ref,       # VMEM inputs (heads)
                      o_ref,                                 # VMEM output
                      h_scr,                                 # VMEM scratch (T,B,2H)
                      *, T, B, W, H, O, N_PAD, OUT_LANES):
    """Gate column layout: [i_f i_b | f_f f_b | g_f g_b | o_f o_b] (each 2H wide).
    Hidden/cell columns: [fwd H | bwd H]."""
    H2 = 2 * H                     # fused (both directions) state width

    # ---- hoisted input projection: one bf16 MXU op for all timesteps & dirs ----
    x = x_ref[...].astype(jnp.bfloat16)                                   # (T*B, 2E)
    gx = jnp.dot(x, wih_ref[...], preferred_element_type=jnp.float32) \
        + b_ref[...]                                                      # (T*B, 8H) f32
    whh = whh_ref[...]                                                    # (2H, 8H) bf16

    # constant lane mask for the [g | o] vreg (first 2H lanes are tanh gates)
    lane_is_g = jax.lax.broadcasted_iota(jnp.int32, (B, 2 * H2), 1) < H2

    h = jnp.zeros((B, H2), jnp.float32)
    c = jnp.zeros((B, H2), jnp.float32)

    # Serial recurrence, fully unrolled (T small & static); only h @ W_hh stays
    # on the per-step critical path.  Hidden states stay in VMEM scratch.
    for t in range(T):
        gates = gx[t * B:(t + 1) * B, :] + jnp.dot(
            h.astype(jnp.bfloat16), whh, preferred_element_type=jnp.float32)  # (B, 8H)
        if_act = jax.nn.sigmoid(gates[:, :2 * H2])          # whole vreg: [i | f]
        go_raw = gates[:, 2 * H2:]                           # whole vreg: [g | o]
        go_act = jnp.where(lane_is_g, jnp.tanh(go_raw), jax.nn.sigmoid(go_raw))
        c = if_act[:, H2:] * c + if_act[:, :H2] * go_act[:, :H2]
        h = go_act[:, H2:] * jnp.tanh(c)
        h_scr[t] = h                                          # tiny VMEM-only store

    # ---- exit gather + per-length un-reversal + pad masking (all in-kernel) ----
    # pad_packed_sequence semantics: positions >= length are zero.
    rows = []
    for b in range(B):
        ln = len_ref[b]
        for w in range(W - 1):
            e_f = exit_ref[b, w + 1]          # forward head uses exits [1:]
            e_b = exit_ref[b, w]              # backward head uses exits [:-1]
            tf = jnp.clip(e_f, 0, T - 1)
            tb = jnp.clip(ln - 1 - e_b, 0, T - 1)   # un-reverse backward time
            vf = h_scr[tf][b:b + 1, :H]                        # (1, H)
            vb = h_scr[tb][b:b + 1, H:]                        # (1, H)
            vf = vf * (e_f < ln).astype(vf.dtype)
            vb = vb * (e_b < ln).astype(vb.dtype)
            rows.append(jnp.concatenate([vf, vb], axis=1))     # (1, 2H)
    n_rows = B * (W - 1)
    if N_PAD > n_rows:
        rows.append(jnp.zeros((N_PAD - n_rows, H2), jnp.float32))
    x_heads = jnp.concatenate(rows, axis=0)                    # (N_PAD, 2H)

    # ---- fused dual-head MLP (block-diagonal weights, bf16 MXU, f32 accum) ----
    hid = jnp.dot(x_heads.astype(jnp.bfloat16), w1_ref[...],
                  preferred_element_type=jnp.float32) + b1_ref[...]
    hid = jnp.maximum(hid, 0.0)
    preds = jnp.dot(hid.astype(jnp.bfloat16), w2_ref[...],
                    preferred_element_type=jnp.float32) + b2_ref[...]     # (N_PAD, 2O)

    # lane-dense output store: pad lanes to OUT_LANES so the vst is unmasked.
    o_ref[...] = jnp.concatenate(
        [preds, jnp.zeros((N_PAD, OUT_LANES - 2 * O), jnp.float32)], axis=1)


# ----------------------------- weight packing ---------------------------------
# Run ONCE at init (pack_params); nothing here is re-executed per forward call.

def _pack_bidir_gates(w_f, w_b, H):
    """w_f, w_b: (D, 4H) with columns [i f g o].  Returns (2D, 8H) block-diagonal
    matrix with gate-grouped columns [i_f i_b | f_f f_b | g_f g_b | o_f o_b]."""
    D = w_f.shape[0]
    z = jnp.zeros((D, H), w_f.dtype)
    cols = []
    for g in range(4):
        cols.append(jnp.concatenate([w_f[:, g * H:(g + 1) * H], z], axis=0))
        cols.append(jnp.concatenate([z, w_b[:, g * H:(g + 1) * H]], axis=0))
    return jnp.concatenate(cols, axis=1)


def _pack_bidir_bias(b_f, b_b, H):
    parts = []
    for g in range(4):
        parts.append(b_f[:, g * H:(g + 1) * H])
        parts.append(b_b[:, g * H:(g + 1) * H])
    return jnp.concatenate(parts, axis=1)          # (1, 8H)


def _blockdiag(a, b):
    Da, Na = a.shape
    Db, Nb = b.shape
    top = jnp.concatenate([a, jnp.zeros((Da, Nb), a.dtype)], axis=1)
    bot = jnp.concatenate([jnp.zeros((Db, Na), b.dtype), b], axis=1)
    return jnp.concatenate([top, bot], axis=0)     # (Da+Db, Na+Nb)


def pack_params(params):
    """One-time packing of raw params into the kernel's fused/bf16 layout."""
    H = params["w_hh_f"].shape[0]
    return {
        "embedding": params["embedding"],
        "w_ih_blk": _pack_bidir_gates(params["w_ih_f"], params["w_ih_b"], H
                                      ).astype(jnp.bfloat16),             # (2E, 8H)
        "w_hh_blk": _pack_bidir_gates(params["w_hh_f"], params["w_hh_b"], H
                                      ).astype(jnp.bfloat16),             # (2H, 8H)
        "b_cat": _pack_bidir_bias(params["b_f"], params["b_b"], H),       # (1, 8H) f32
        "w1_blk": _blockdiag(params["fw1"], params["bw1"]).astype(jnp.bfloat16),
        "b1_cat": jnp.concatenate([params["fb1"], params["bb1"]], axis=1),
        "w2_blk": _blockdiag(params["fw2"], params["bw2"]).astype(jnp.bfloat16),
        "b2_cat": jnp.concatenate([params["fb2"], params["bb2"]], axis=1),
    }


# ----------------------------- full forward (Pallas) --------------------------

def character_level_network_forward(packed, char_seqs, exit_seqs, lengths):
    B, T = char_seqs.shape
    W = exit_seqs.shape[1]
    H = packed["w_hh_blk"].shape[0] // 2
    O = packed["w2_blk"].shape[1] // 2
    E = packed["embedding"].shape[1]

    # --- embedding lookup + per-length reversal for the backward direction ---
    emb = jnp.take(packed["embedding"], char_seqs, axis=0)            # (B, T, E)
    t_idx = jnp.arange(T)[None, :]
    valid = t_idx < lengths[:, None]
    rev_idx = jnp.clip(lengths[:, None] - 1 - t_idx, 0, T - 1)
    emb_rev = jnp.take_along_axis(emb, rev_idx[:, :, None], axis=1)
    emb_rev = jnp.where(valid[:, :, None], emb_rev, 0.0)

    # (T, B, E) fwd | (T, B, E) bwd  ->  (T*B, 2E) fused kernel input (bf16 MXU operand)
    x_flat = jnp.concatenate(
        [jnp.transpose(emb, (1, 0, 2)), jnp.transpose(emb_rev, (1, 0, 2))],
        axis=-1).reshape(T * B, 2 * E).astype(jnp.bfloat16)

    Wm1 = W - 1
    N = B * Wm1
    N_PAD = ((N + 7) // 8) * 8
    OUT_LANES = 128

    kernel = functools.partial(_cln_fused_kernel, T=T, B=B, W=W, H=H, O=O,
                               N_PAD=N_PAD, OUT_LANES=OUT_LANES)
    full = lambda i, *_: (0, 0)   # everything resident; grid=(1,)

    out = pl.pallas_call(
        kernel,
        out_shape=jax.ShapeDtypeStruct((N_PAD, OUT_LANES), jnp.float32),
        grid_spec=pltpu.PrefetchScalarGridSpec(
            num_scalar_prefetch=2,              # exit_seqs, lengths -> SMEM
            grid=(1,),
            in_specs=[
                pl.BlockSpec((T * B, 2 * E), full),
                pl.BlockSpec(packed["w_ih_blk"].shape, full),
                pl.BlockSpec(packed["w_hh_blk"].shape, full),
                pl.BlockSpec(packed["b_cat"].shape, full),
                pl.BlockSpec(packed["w1_blk"].shape, full),
                pl.BlockSpec(packed["b1_cat"].shape, full),
                pl.BlockSpec(packed["w2_blk"].shape, full),
                pl.BlockSpec(packed["b2_cat"].shape, full),
            ],
            out_specs=pl.BlockSpec((N_PAD, OUT_LANES), full),
            scratch_shapes=[pltpu.VMEM((T, B, 2 * H), jnp.float32)],
        ),
        compiler_params=pltpu.CompilerParams(dimension_semantics=("arbitrary",)),
    )(exit_seqs.astype(jnp.int32), lengths.astype(jnp.int32),
      x_flat, packed["w_ih_blk"], packed["w_hh_blk"], packed["b_cat"],
      packed["w1_blk"], packed["b1_cat"], packed["w2_blk"], packed["b2_cat"])

    pred_fwd = out[:N, :O].reshape(B, Wm1, O)
    pred_bwd = out[:N, O:2 * O].reshape(B, Wm1, O)
    return pred_fwd, pred_bwd


# ---------------------- pure-JAX reference (for self-check) -------------------

def _cast(a, mxu_bf16):
    return a.astype(jnp.bfloat16) if mxu_bf16 else a


def lstm_ref(x_tbe, w_ih, w_hh, b, mxu_bf16=False):
    H = w_hh.shape[0]
    B = x_tbe.shape[1]
    w_ih_c, w_hh_c = _cast(w_ih, mxu_bf16), _cast(w_hh, mxu_bf16)

    def step(carry, x_t):
        h, c = carry
        gates = (jnp.dot(_cast(x_t, mxu_bf16), w_ih_c, preferred_element_type=jnp.float32)
                 + jnp.dot(_cast(h, mxu_bf16), w_hh_c, preferred_element_type=jnp.float32)
                 + b[0])
        i = jax.nn.sigmoid(gates[:, :H])
        f = jax.nn.sigmoid(gates[:, H:2 * H])
        g = jnp.tanh(gates[:, 2 * H:3 * H])
        o = jax.nn.sigmoid(gates[:, 3 * H:])
        c = f * c + i * g
        h = o * jnp.tanh(c)
        return (h, c), h

    (_, _), hs = jax.lax.scan(
        step, (jnp.zeros((B, H), jnp.float32), jnp.zeros((B, H), jnp.float32)), x_tbe)
    return hs


def head_ref(x, w1, b1, w2, b2, mxu_bf16=False):
    h = jnp.dot(_cast(x, mxu_bf16), _cast(w1, mxu_bf16),
                preferred_element_type=jnp.float32) + b1
    h = jnp.maximum(h, 0.0)
    return jnp.dot(_cast(h, mxu_bf16), _cast(w2, mxu_bf16),
                   preferred_element_type=jnp.float32) + b2


def reference_forward(params, char_seqs, exit_seqs, lengths, mxu_bf16=False):
    B, T = char_seqs.shape
    H = params["w_hh_f"].shape[0]
    O = params["fw2"].shape[1]

    emb = jnp.take(params["embedding"], char_seqs, axis=0)
    t_idx = jnp.arange(T)[None, :]
    valid = t_idx < lengths[:, None]
    rev_idx = jnp.clip(lengths[:, None] - 1 - t_idx, 0, T - 1)

    x_f = jnp.transpose(emb, (1, 0, 2))
    h_f = jnp.transpose(
        lstm_ref(x_f, params["w_ih_f"], params["w_hh_f"], params["b_f"], mxu_bf16),
        (1, 0, 2))

    emb_rev = jnp.take_along_axis(emb, rev_idx[:, :, None], axis=1)
    emb_rev = jnp.where(valid[:, :, None], emb_rev, 0.0)
    x_b = jnp.transpose(emb_rev, (1, 0, 2))
    h_b_rev = jnp.transpose(
        lstm_ref(x_b, params["w_ih_b"], params["w_hh_b"], params["b_b"], mxu_bf16),
        (1, 0, 2))
    h_b = jnp.take_along_axis(h_b_rev, rev_idx[:, :, None], axis=1)

    h_f = jnp.where(valid[:, :, None], h_f, 0.0)
    h_b = jnp.where(valid[:, :, None], h_b, 0.0)

    out_fwd = jnp.take_along_axis(h_f, exit_seqs[:, :, None], axis=1)
    out_bwd = jnp.take_along_axis(h_b, exit_seqs[:, :, None], axis=1)
    fwd_in = out_fwd[:, 1:, :]
    bwd_in = out_bwd[:, :-1, :]
    Wm1 = fwd_in.shape[1]

    pred_fwd = head_ref(fwd_in.reshape(B * Wm1, H), params["fw1"], params["fb1"],
                        params["fw2"], params["fb2"], mxu_bf16)
    pred_bwd = head_ref(bwd_in.reshape(B * Wm1, H), params["bw1"], params["bb1"],
                        params["bw2"], params["bb2"], mxu_bf16)
    return pred_fwd.reshape(B, Wm1, O), pred_bwd.reshape(B, Wm1, O)


# ----------------------------- parameter init ---------------------------------

def init_params(key, input_dim, E, H, O):
    ks = jax.random.split(key, 16)
    s_lstm = 1.0 / (H ** 0.5)
    s_l1 = 1.0 / (H ** 0.5)
    s_l2 = 1.0 / ((H // 2) ** 0.5)

    def u(k, shape, s):
        return jax.random.uniform(k, shape, jnp.float32, -s, s)

    return {
        "embedding": jax.random.normal(ks[0], (input_dim, E), jnp.float32),
        # forward-direction LSTM (weights stored transposed: (in, 4H), gate order i f g o)
        "w_ih_f": u(ks[1], (E, 4 * H), s_lstm),
        "w_hh_f": u(ks[2], (H, 4 * H), s_lstm),
        "b_f":    u(ks[3], (1, 4 * H), s_lstm),   # = b_ih + b_hh folded
        # backward-direction LSTM
        "w_ih_b": u(ks[4], (E, 4 * H), s_lstm),
        "w_hh_b": u(ks[5], (H, 4 * H), s_lstm),
        "b_b":    u(ks[6], (1, 4 * H), s_lstm),
        # head_fwd
        "fw1": u(ks[7], (H, H // 2), s_l1), "fb1": u(ks[8], (1, H // 2), s_l1),
        "fw2": u(ks[9], (H // 2, O), s_l2), "fb2": u(ks[10], (1, O), s_l2),
        # head_bwd
        "bw1": u(ks[11], (H, H // 2), s_l1), "bb1": u(ks[12], (1, H // 2), s_l1),
        "bw2": u(ks[13], (H // 2, O), s_l2), "bb2": u(ks[14], (1, O), s_l2),
    }


# ----------------------------------- main --------------------------------------

if __name__ == "__main__":
    input_dim, E, H, O = 50, 8, 32, 4     # vocab, embedding_dim, hidden_dim, output_dim
    B, T, W = 2, 8, 4                     # batch, char-seq length, exit positions

    key = jax.random.PRNGKey(0)
    kp, kc = jax.random.split(key)
    params = init_params(kp, input_dim, E, H, O)
    packed = pack_params(params)          # one-time weight packing (hoisted out of forward)

    char_seqs = jax.random.randint(kc, (B, T), 0, input_dim, dtype=jnp.int32)
    lengths = jnp.array([8, 6], dtype=jnp.int32)                  # sorted descending
    exit_seqs = jnp.array([[0, 2, 5, 7], [0, 1, 3, 5]], dtype=jnp.int32)

    forward = jax.jit(character_level_network_forward)
    pred_fwd, pred_bwd = forward(packed, char_seqs, exit_seqs, lengths)
    jax.block_until_ready((pred_fwd, pred_bwd))

    assert pred_fwd.shape == (B, W - 1, O) and pred_bwd.shape == (B, W - 1, O)

    # 1) tight check vs a reference using the same bf16-operand / f32-accum math
    ref_fwd_m, ref_bwd_m = reference_forward(params, char_seqs, exit_seqs, lengths,
                                             mxu_bf16=True)
    assert jnp.allclose(pred_fwd, ref_fwd_m, atol=5e-3), "fwd mismatch (bf16-matched ref)"
    assert jnp.allclose(pred_bwd, ref_bwd_m, atol=5e-3), "bwd mismatch (bf16-matched ref)"

    # 2) looser sanity check vs the pure-f32 reference (bf16 MXU operands in kernel)
    ref_fwd_f, ref_bwd_f = reference_forward(params, char_seqs, exit_seqs, lengths,
                                             mxu_bf16=False)
    assert jnp.allclose(pred_fwd, ref_fwd_f, atol=3e-2), "fwd mismatch (f32 ref)"
    assert jnp.allclose(pred_bwd, ref_bwd_f, atol=3e-2), "bwd mismatch (f32 ref)"

    print("KERNEL_OK")
</pallas_src>

<mosaic_0001>
module attributes {stable_mosaic.version = 11 : i64} {
  func.func @_cln_fused_kernel(%arg0: i32, %arg1: memref<2x4xi32, #tpu.memory_space<smem>>, %arg2: memref<2xi32, #tpu.memory_space<smem>>, %arg3: memref<16x16xbf16, #tpu.memory_space<vmem>>, %arg4: memref<16x256xbf16, #tpu.memory_space<vmem>>, %arg5: memref<64x256xbf16, #tpu.memory_space<vmem>>, %arg6: memref<1x256xf32, #tpu.memory_space<vmem>>, %arg7: memref<64x32xbf16, #tpu.memory_space<vmem>>, %arg8: memref<1x32xf32, #tpu.memory_space<vmem>>, %arg9: memref<32x8xbf16, #tpu.memory_space<vmem>>, %arg10: memref<1x8xf32, #tpu.memory_space<vmem>>, %arg11: memref<8x128xf32, #tpu.memory_space<vmem>>, %arg12: memref<8x2x64xf32, #tpu.memory_space<vmem>>) attributes {dimension_semantics = [#tpu.dimension_semantics<arbitrary>], iteration_bounds = array<i64: 1>, scalar_prefetch = 2 : i64, scratch_operands = 1 : i64, tpu.core_type = #tpu.core_type<tc>, window_params = [{pipeline_mode = #tpu.pipeline_mode<synchronous>, transform_indices = @transform_0, window_bounds = array<i64: 16, 16>}, {pipeline_mode = #tpu.pipeline_mode<synchronous>, transform_indices = @transform_1, window_bounds = array<i64: 16, 256>}, {pipeline_mode = #tpu.pipeline_mode<synchronous>, transform_indices = @transform_2, window_bounds = array<i64: 64, 256>}, {pipeline_mode = #tpu.pipeline_mode<synchronous>, transform_indices = @transform_3, window_bounds = array<i64: 1, 256>}, {pipeline_mode = #tpu.pipeline_mode<synchronous>, transform_indices = @transform_4, window_bounds = array<i64: 64, 32>}, {pipeline_mode = #tpu.pipeline_mode<synchronous>, transform_indices = @transform_5, window_bounds = array<i64: 1, 32>}, {pipeline_mode = #tpu.pipeline_mode<synchronous>, transform_indices = @transform_6, window_bounds = array<i64: 32, 8>}, {pipeline_mode = #tpu.pipeline_mode<synchronous>, transform_indices = @transform_7, window_bounds = array<i64: 1, 8>}, {pipeline_mode = #tpu.pipeline_mode<synchronous>, transform_indices = @transform_8, window_bounds = array<i64: 8, 128>}]} {
    %c0 = arith.constant 0 : index
    %c0_0 = arith.constant 0 : index
    %0 = vector.load %arg3[%c0, %c0_0] : memref<16x16xbf16, #tpu.memory_space<vmem>>, vector<16x16xbf16>
    %c0_1 = arith.constant 0 : index
    %c0_2 = arith.constant 0 : index
    %1 = vector.load %arg4[%c0_1, %c0_2] : memref<16x256xbf16, #tpu.memory_space<vmem>>, vector<16x256xbf16>
    %cst = arith.constant dense<0.000000e+00> : vector<16x256xf32>
    %2 = tpu.matmul %0, %1, %cst {dimension_numbers = #tpu.dot_dimension_numbers<[1], [0], [0], [1], [0, 0, 1, 1], [], []>} : vector<16x16xbf16>, vector<16x256xbf16>, vector<16x256xf32> -> vector<16x256xf32>
    %c0_3 = arith.constant 0 : index
    %c0_4 = arith.constant 0 : index
    %3 = vector.load %arg6[%c0_3, %c0_4] : memref<1x256xf32, #tpu.memory_space<vmem>>, vector<1x256xf32>
    %4 = vector.broadcast %3 : vector<1x256xf32> to vector<16x256xf32>
    %5 = arith.addf %2, %4 : vector<16x256xf32>
    %c0_5 = arith.constant 0 : index
    %c0_6 = arith.constant 0 : index
    %6 = vector.load %arg5[%c0_5, %c0_6] : memref<64x256xbf16, #tpu.memory_space<vmem>>, vector<64x256xbf16>
    %7 = tpu.iota {dimensions = array<i32: 1>} : vector<2x128xi32>
    %c64_i32 = arith.constant 64 : i32
    %8 = vector.broadcast %c64_i32 : i32 to vector<2x128xi32>
    %9 = arith.cmpi slt, %7, %8 : vector<2x128xi32>
    %cst_7 = arith.constant 0.000000e+00 : f32
    %10 = vector.broadcast %cst_7 : f32 to vector<2x64xf32>
    %cst_8 = arith.constant 0.000000e+00 : f32
    %11 = vector.broadcast %cst_8 : f32 to vector<2x64xf32>
    %12 = vector.extract_strided_slice %5 {offsets = [0, 0], sizes = [2, 256], strides = [1, 1]} : vector<16x256xf32> to vector<2x256xf32>
    %13 = arith.truncf %10 : vector<2x64xf32> to vector<2x64xbf16>
    %cst_9 = arith.constant dense<0.000000e+00> : vector<2x256xf32>
    %14 = tpu.matmul %13, %6, %cst_9 {dimension_numbers = #tpu.dot_dimension_numbers<[1], [0], [0], [1], [0, 0, 1, 1], [], []>} : vector<2x64xbf16>, vector<64x256xbf16>, vector<2x256xf32> -> vector<2x256xf32>
    %15 = arith.addf %12, %14 : vector<2x256xf32>
    %16 = vector.extract_strided_slice %15 {offsets = [0, 0], sizes = [2, 128], strides = [1, 1]} : vector<2x256xf32> to vector<2x128xf32>
    %17 = arith.negf %16 : vector<2x128xf32>
    %18 = math.exp %17 : vector<2x128xf32>
    %cst_10 = arith.constant 1.000000e+00 : f32
    %19 = vector.broadcast %cst_10 : f32 to vector<2x128xf32>
    %20 = arith.addf %19, %18 : vector<2x128xf32>
    %21 = arith.divf %19, %20 : vector<2x128xf32>
    %22 = vector.extract_strided_slice %15 {offsets = [0, 128], sizes = [2, 128], strides = [1, 1]} : vector<2x256xf32> to vector<2x128xf32>
    %23 = math.tanh %22 : vector<2x128xf32>
    %24 = arith.negf %22 : vector<2x128xf32>
    %25 = math.exp %24 : vector<2x128xf32>
    %cst_11 = arith.constant 1.000000e+00 : f32
    %26 = vector.broadcast %cst_11 : f32 to vector<2x128xf32>
    %27 = arith.addf %26, %25 : vector<2x128xf32>
    %28 = arith.divf %26, %27 : vector<2x128xf32>
    %29 = arith.select %9, %23, %28 : vector<2x128xi1>, vector<2x128xf32>
    %30 = vector.extract_strided_slice %21 {offsets = [0, 64], sizes = [2, 64], strides = [1, 1]} : vector<2x128xf32> to vector<2x64xf32>
    %31 = arith.mulf %30, %11 : vector<2x64xf32>
    %32 = vector.extract_strided_slice %21 {offsets = [0, 0], sizes = [2, 64], strides = [1, 1]} : vector<2x128xf32> to vector<2x64xf32>
    %33 = vector.extract_strided_slice %29 {offsets = [0, 0], sizes = [2, 64], strides = [1, 1]} : vector<2x128xf32> to vector<2x64xf32>
    %34 = arith.mulf %32, %33 : vector<2x64xf32>
    %35 = arith.addf %31, %34 : vector<2x64xf32>
    %36 = vector.extract_strided_slice %29 {offsets = [0, 64], sizes = [2, 64], strides = [1, 1]} : vector<2x128xf32> to vector<2x64xf32>
    %37 = math.tanh %35 : vector<2x64xf32>
    %38 = arith.mulf %36, %37 : vector<2x64xf32>
    %c0_12 = arith.constant 0 : index
    %c0_13 = arith.constant 0 : index
    %c0_14 = arith.constant 0 : index
    %39 = vector.load %arg12[%c0_12, %c0_13, %c0_14] : memref<8x2x64xf32, #tpu.memory_space<vmem>>, vector<1x2x64xf32>
    %40 = vector.shape_cast %39 : vector<1x2x64xf32> to vector<2x64xf32>
    %41 = vector.shape_cast %38 : vector<2x64xf32> to vector<1x2x64xf32>
    tpu.vector_store %arg12[%c0_12, %c0_13, %c0_14], %41 {strides = array<i32>} : memref<8x2x64xf32, #tpu.memory_space<vmem>>, vector<1x2x64xf32>,
    %42 = vector.extract_strided_slice %5 {offsets = [2, 0], sizes = [2, 256], strides = [1, 1]} : vector<16x256xf32> to vector<2x256xf32>
    %43 = arith.truncf %38 : vector<2x64xf32> to vector<2x64xbf16>
    %cst_15 = arith.constant dense<0.000000e+00> : vector<2x256xf32>
    %44 = tpu.matmul %43, %6, %cst_15 {dimension_numbers = #tpu.dot_dimension_numbers<[1], [0], [0], [1], [0, 0, 1, 1], [], []>} : vector<2x64xbf16>, vector<64x256xbf16>, vector<2x256xf32> -> vector<2x256xf32>
    %45 = arith.addf %42, %44 : vector<2x256xf32>
    %46 = vector.extract_strided_slice %45 {offsets = [0, 0], sizes = [2, 128], strides = [1, 1]} : vector<2x256xf32> to vector<2x128xf32>
    %47 = arith.negf %46 : vector<2x128xf32>
    %48 = math.exp %47 : vector<2x128xf32>
    %cst_16 = arith.constant 1.000000e+00 : f32
    %49 = vector.broadcast %cst_16 : f32 to vector<2x128xf32>
    %50 = arith.addf %49, %48 : vector<2x128xf32>
    %51 = arith.divf %49, %50 : vector<2x128xf32>
    %52 = vector.extract_strided_slice %45 {offsets = [0, 128], sizes = [2, 128], strides = [1, 1]} : vector<2x256xf32> to vector<2x128xf32>
    %53 = math.tanh %52 : vector<2x128xf32>
    %54 = arith.negf %52 : vector<2x128xf32>
    %55 = math.exp %54 : vector<2x128xf32>
    %cst_17 = arith.constant 1.000000e+00 : f32
    %56 = vector.broadcast %cst_17 : f32 to vector<2x128xf32>
    %57 = arith.addf %56, %55 : vector<2x128xf32>
    %58 = arith.divf %56, %57 : vector<2x128xf32>
    %59 = arith.select %9, %53, %58 : vector<2x128xi1>, vector<2x128xf32>
    %60 = vector.extract_strided_slice %51 {offsets = [0, 64], sizes = [2, 64], strides = [1, 1]} : vector<2x128xf32> to vector<2x64xf32>
    %61 = arith.mulf %60, %35 : vector<2x64xf32>
    %62 = vector.extract_strided_slice %51 {offsets = [0, 0], sizes = [2, 64], strides = [1, 1]} : vector<2x128xf32> to vector<2x64xf32>
    %63 = vector.extract_strided_slice %59 {offsets = [0, 0], sizes = [2, 64], strides = [1, 1]} : vector<2x128xf32> to vector<2x64xf32>
    %64 = arith.mulf %62, %63 : vector<2x64xf32>
    %65 = arith.addf %61, %64 : vector<2x64xf32>
    %66 = vector.extract_strided_slice %59 {offsets = [0, 64], sizes = [2, 64], strides = [1, 1]} : vector<2x128xf32> to vector<2x64xf32>
    %67 = math.tanh %65 : vector<2x64xf32>
    %68 = arith.mulf %66, %67 : vector<2x64xf32>
    %c1 = arith.constant 1 : index
    %c0_18 = arith.constant 0 : index
    %c0_19 = arith.constant 0 : index
    %69 = vector.load %arg12[%c1, %c0_18, %c0_19] : memref<8x2x64xf32, #tpu.memory_space<vmem>>, vector<1x2x64xf32>
    %70 = vector.shape_cast %69 : vector<1x2x64xf32> to vector<2x64xf32>
    %71 = vector.shape_cast %68 : vector<2x64xf32> to vector<1x2x64xf32>
    tpu.vector_store %arg12[%c1, %c0_18, %c0_19], %71 {strides = array<i32>} : memref<8x2x64xf32, #tpu.memory_space<vmem>>, vector<1x2x64xf32>,
    %72 = vector.extract_strided_slice %5 {offsets = [4, 0], sizes = [2, 256], strides = [1, 1]} : vector<16x256xf32> to vector<2x256xf32>
    %73 = arith.truncf %68 : vector<2x64xf32> to vector<2x64xbf16>
    %cst_20 = arith.constant dense<0.000000e+00> : vector<2x256xf32>
    %74 = tpu.matmul %73, %6, %cst_20 {dimension_numbers = #tpu.dot_dimension_numbers<[1], [0], [0], [1], [0, 0, 1, 1], [], []>} : vector<2x64xbf16>, vector<64x256xbf16>, vector<2x256xf32> -> vector<2x256xf32>
    %75 = arith.addf %72, %74 : vector<2x256xf32>
    %76 = vector.extract_strided_slice %75 {offsets = [0, 0], sizes = [2, 128], strides = [1, 1]} : vector<2x256xf32> to vector<2x128xf32>
    %77 = arith.negf %76 : vector<2x128xf32>
    %78 = math.exp %77 : vector<2x128xf32>
    %cst_21 = arith.constant 1.000000e+00 : f32
    %79 = vector.broadcast %cst_21 : f32 to vector<2x128xf32>
    %80 = arith.addf %79, %78 : vector<2x128xf32>
    %81 = arith.divf %79, %80 : vector<2x128xf32>
    %82 = vector.extract_strided_slice %75 {offsets = [0, 128], sizes = [2, 128], strides = [1, 1]} : vector<2x256xf32> to vector<2x128xf32>
    %83 = math.tanh %82 : vector<2x128xf32>
    %84 = arith.negf %82 : vector<2x128xf32>
    %85 = math.exp %84 : vector<2x128xf32>
    %cst_22 = arith.constant 1.000000e+00 : f32
    %86 = vector.broadcast %cst_22 : f32 to vector<2x128xf32>
    %87 = arith.addf %86, %85 : vector<2x128xf32>
    %88 = arith.divf %86, %87 : vector<2x128xf32>
    %89 = arith.select %9, %83, %88 : vector<2x128xi1>, vector<2x128xf32>
    %90 = vector.extract_strided_slice %81 {offsets = [0, 64], sizes = [2, 64], strides = [1, 1]} : vector<2x128xf32> to vector<2x64xf32>
    %91 = arith.mulf %90, %65 : vector<2x64xf32>
    %92 = vector.extract_strided_slice %81 {offsets = [0, 0], sizes = [2, 64], strides = [1, 1]} : vector<2x128xf32> to vector<2x64xf32>
    %93 = vector.extract_strided_slice %89 {offsets = [0, 0], sizes = [2, 64], strides = [1, 1]} : vector<2x128xf32> to vector<2x64xf32>
    %94 = arith.mulf %92, %93 : vector<2x64xf32>
    %95 = arith.addf %91, %94 : vector<2x64xf32>
    %96 = vector.extract_strided_slice %89 {offsets = [0, 64], sizes = [2, 64], strides = [1, 1]} : vector<2x128xf32> to vector<2x64xf32>
    %97 = math.tanh %95 : vector<2x64xf32>
    %98 = arith.mulf %96, %97 : vector<2x64xf32>
    %c2 = arith.constant 2 : index
    %c0_23 = arith.constant 0 : index
    %c0_24 = arith.constant 0 : index
    %99 = vector.load %arg12[%c2, %c0_23, %c0_24] : memref<8x2x64xf32, #tpu.memory_space<vmem>>, vector<1x2x64xf32>
    %100 = vector.shape_cast %99 : vector<1x2x64xf32> to vector<2x64xf32>
    %101 = vector.shape_cast %98 : vector<2x64xf32> to vector<1x2x64xf32>
    tpu.vector_store %arg12[%c2, %c0_23, %c0_24], %101 {strides = array<i32>} : memref<8x2x64xf32, #tpu.memory_space<vmem>>, vector<1x2x64xf32>,
    %102 = vector.extract_strided_slice %5 {offsets = [6, 0], sizes = [2, 256], strides = [1, 1]} : vector<16x256xf32> to vector<2x256xf32>
    %103 = arith.truncf %98 : vector<2x64xf32> to vector<2x64xbf16>
    %cst_25 = arith.constant dense<0.000000e+00> : vector<2x256xf32>
    %104 = tpu.matmul %103, %6, %cst_25 {dimension_numbers = #tpu.dot_dimension_numbers<[1], [0], [0], [1], [0, 0, 1, 1], [], []>} : vector<2x64xbf16>, vector<64x256xbf16>, vector<2x256xf32> -> vector<2x256xf32>
    %105 = arith.addf %102, %104 : vector<2x256xf32>
    %106 = vector.extract_strided_slice %105 {offsets = [0, 0], sizes = [2, 128], strides = [1, 1]} : vector<2x256xf32> to vector<2x128xf32>
    %107 = arith.negf %106 : vector<2x128xf32>
    %108 = math.exp %107 : vector<2x128xf32>
    %cst_26 = arith.constant 1.000000e+00 : f32
    %109 = vector.broadcast %cst_26 : f32 to vector<2x128xf32>
    %110 = arith.addf %109, %108 : vector<2x128xf32>
    %111 = arith.divf %109, %110 : vector<2x128xf32>
    %112 = vector.extract_strided_slice %105 {offsets = [0, 128], sizes = [2, 128], strides = [1, 1]} : vector<2x256xf32> to vector<2x128xf32>
    %113 = math.tanh %112 : vector<2x128xf32>
    %114 = arith.negf %112 : vector<2x128xf32>
    %115 = math.exp %114 : vector<2x128xf32>
    %cst_27 = arith.constant 1.000000e+00 : f32
    %116 = vector.broadcast %cst_27 : f32 to vector<2x128xf32>
    %117 = arith.addf %116, %115 : vector<2x128xf32>
    %118 = arith.divf %116, %117 : vector<2x128xf32>
    %119 = arith.select %9, %113, %118 : vector<2x128xi1>, vector<2x128xf32>
    %120 = vector.extract_strided_slice %111 {offsets = [0, 64], sizes = [2, 64], strides = [1, 1]} : vector<2x128xf32> to vector<2x64xf32>
    %121 = arith.mulf %120, %95 : vector<2x64xf32>
    %122 = vector.extract_strided_slice %111 {offsets = [0, 0], sizes = [2, 64], strides = [1, 1]} : vector<2x128xf32> to vector<2x64xf32>
    %123 = vector.extract_strided_slice %119 {offsets = [0, 0], sizes = [2, 64], strides = [1, 1]} : vector<2x128xf32> to vector<2x64xf32>
    %124 = arith.mulf %122, %123 : vector<2x64xf32>
    %125 = arith.addf %121, %124 : vector<2x64xf32>
    %126 = vector.extract_strided_slice %119 {offsets = [0, 64], sizes = [2, 64], strides = [1, 1]} : vector<2x128xf32> to vector<2x64xf32>
    %127 = math.tanh %125 : vector<2x64xf32>
    %128 = arith.mulf %126, %127 : vector<2x64xf32>
    %c3 = arith.constant 3 : index
    %c0_28 = arith.constant 0 : index
    %c0_29 = arith.constant 0 : index
    %129 = vector.load %arg12[%c3, %c0_28, %c0_29] : memref<8x2x64xf32, #tpu.memory_space<vmem>>, vector<1x2x64xf32>
    %130 = vector.shape_cast %129 : vector<1x2x64xf32> to vector<2x64xf32>
    %131 = vector.shape_cast %128 : vector<2x64xf32> to vector<1x2x64xf32>
    tpu.vector_store %arg12[%c3, %c0_28, %c0_29], %131 {strides = array<i32>} : memref<8x2x64xf32, #tpu.memory_space<vmem>>, vector<1x2x64xf32>,
    %132 = vector.extract_strided_slice %5 {offsets = [8, 0], sizes = [2, 256], strides = [1, 1]} : vector<16x256xf32> to vector<2x256xf32>
    %133 = arith.truncf %128 : vector<2x64xf32> to vector<2x64xbf16>
    %cst_30 = arith.constant dense<0.000000e+00> : vector<2x256xf32>
    %134 = tpu.matmul %133, %6, %cst_30 {dimension_numbers = #tpu.dot_dimension_numbers<[1], [0], [0], [1], [0, 0, 1, 1], [], []>} : vector<2x64xbf16>, vector<64x256xbf16>, vector<2x256xf32> -> vector<2x256xf32>
    %135 = arith.addf %132, %134 : vector<2x256xf32>
    %136 = vector.extract_strided_slice %135 {offsets = [0, 0], sizes = [2, 128], strides = [1, 1]} : vector<2x256xf32> to vector<2x128xf32>
    %137 = arith.negf %136 : vector<2x128xf32>
    %138 = math.exp %137 : vector<2x128xf32>
    %cst_31 = arith.constant 1.000000e+00 : f32
    %139 = vector.broadcast %cst_31 : f32 to vector<2x128xf32>
    %140 = arith.addf %139, %138 : vector<2x128xf32>
    %141 = arith.divf %139, %140 : vector<2x128xf32>
    %142 = vector.extract_strided_slice %135 {offsets = [0, 128], sizes = [2, 128], strides = [1, 1]} : vector<2x256xf32> to vector<2x128xf32>
    %143 = math.tanh %142 : vector<2x128xf32>
    %144 = arith.negf %142 : vector<2x128xf32>
    %145 = math.exp %144 : vector<2x128xf32>
    %cst_32 = arith.constant 1.000000e+00 : f32
    %146 = vector.broadcast %cst_32 : f32 to vector<2x128xf32>
    %147 = arith.addf %146, %145 : vector<2x128xf32>
    %148 = arith.divf %146, %147 : vector<2x128xf32>
    %149 = arith.select %9, %143, %148 : vector<2x128xi1>, vector<2x128xf32>
    %150 = vector.extract_strided_slice %141 {offsets = [0, 64], sizes = [2, 64], strides = [1, 1]} : vector<2x128xf32> to vector<2x64xf32>
    %151 = arith.mulf %150, %125 : vector<2x64xf32>
    %152 = vector.extract_strided_slice %141 {offsets = [0, 0], sizes = [2, 64], strides = [1, 1]} : vector<2x128xf32> to vector<2x64xf32>
    %153 = vector.extract_strided_slice %149 {offsets = [0, 0], sizes = [2, 64], strides = [1, 1]} : vector<2x128xf32> to vector<2x64xf32>
    %154 = arith.mulf %152, %153 : vector<2x64xf32>
    %155 = arith.addf %151, %154 : vector<2x64xf32>
    %156 = vector.extract_strided_slice %149 {offsets = [0, 64], sizes = [2, 64], strides = [1, 1]} : vector<2x128xf32> to vector<2x64xf32>
    %157 = math.tanh %155 : vector<2x64xf32>
    %158 = arith.mulf %156, %157 : vector<2x64xf32>
    %c4 = arith.constant 4 : index
    %c0_33 = arith.constant 0 : index
    %c0_34 = arith.constant 0 : index
    %159 = vector.load %arg12[%c4, %c0_33, %c0_34] : memref<8x2x64xf32, #tpu.memory_space<vmem>>, vector<1x2x64xf32>
    %160 = vector.shape_cast %159 : vector<1x2x64xf32> to vector<2x64xf32>
    %161 = vector.shape_cast %158 : vector<2x64xf32> to vector<1x2x64xf32>
    tpu.vector_store %arg12[%c4, %c0_33, %c0_34], %161 {strides = array<i32>} : memref<8x2x64xf32, #tpu.memory_space<vmem>>, vector<1x2x64xf32>,
    %162 = vector.extract_strided_slice %5 {offsets = [10, 0], sizes = [2, 256], strides = [1, 1]} : vector<16x256xf32> to vector<2x256xf32>
    %163 = arith.truncf %158 : vector<2x64xf32> to vector<2x64xbf16>
    %cst_35 = arith.constant dense<0.000000e+00> : vector<2x256xf32>
    %164 = tpu.matmul %163, %6, %cst_35 {dimension_numbers = #tpu.dot_dimension_numbers<[1], [0], [0], [1], [0, 0, 1, 1], [], []>} : vector<2x64xbf16>, vector<64x256xbf16>, vector<2x256xf32> -> vector<2x256xf32>
    %165 = arith.addf %162, %164 : vector<2x256xf32>
    %166 = vector.extract_strided_slice %165 {offsets = [0, 0], sizes = [2, 128], strides = [1, 1]} : vector<2x256xf32> to vector<2x128xf32>
    %167 = arith.negf %166 : vector<2x128xf32>
    %168 = math.exp %167 : vector<2x128xf32>
    %cst_36 = arith.constant 1.000000e+00 : f32
    %169 = vector.broadcast %cst_36 : f32 to vector<2x128xf32>
    %170 = arith.addf %169, %168 : vector<2x128xf32>
    %171 = arith.divf %169, %170 : vector<2x128xf32>
    %172 = vector.extract_strided_slice %165 {offsets = [0, 128], sizes = [2, 128], strides = [1, 1]} : vector<2x256xf32> to vector<2x128xf32>
    %173 = math.tanh %172 : vector<2x128xf32>
    %174 = arith.negf %172 : vector<2x128xf32>
    %175 = math.exp %174 : vector<2x128xf32>
    %cst_37 = arith.constant 1.000000e+00 : f32
    %176 = vector.broadcast %cst_37 : f32 to vector<2x128xf32>
    %177 = arith.addf %176, %175 : vector<2x128xf32>
    %178 = arith.divf %176, %177 : vector<2x128xf32>
    %179 = arith.select %9, %173, %178 : vector<2x128xi1>, vector<2x128xf32>
    %180 = vector.extract_strided_slice %171 {offsets = [0, 64], sizes = [2, 64], strides = [1, 1]} : vector<2x128xf32> to vector<2x64xf32>
    %181 = arith.mulf %180, %155 : vector<2x64xf32>
    %182 = vector.extract_strided_slice %171 {offsets = [0, 0], sizes = [2, 64], strides = [1, 1]} : vector<2x128xf32> to vector<2x64xf32>
    %183 = vector.extract_strided_slice %179 {offsets = [0, 0], sizes = [2, 64], strides = [1, 1]} : vector<2x128xf32> to vector<2x64xf32>
    %184 = arith.mulf %182, %183 : vector<2x64xf32>
    %185 = arith.addf %181, %184 : vector<2x64xf32>
    %186 = vector.extract_strided_slice %179 {offsets = [0, 64], sizes = [2, 64], strides = [1, 1]} : vector<2x128xf32> to vector<2x64xf32>
    %187 = math.tanh %185 : vector<2x64xf32>
    %188 = arith.mulf %186, %187 : vector<2x64xf32>
    %c5 = arith.constant 5 : index
    %c0_38 = arith.constant 0 : index
    %c0_39 = arith.constant 0 : index
    %189 = vector.load %arg12[%c5, %c0_38, %c0_39] : memref<8x2x64xf32, #tpu.memory_space<vmem>>, vector<1x2x64xf32>
    %190 = vector.shape_cast %189 : vector<1x2x64xf32> to vector<2x64xf32>
    %191 = vector.shape_cast %188 : vector<2x64xf32> to vector<1x2x64xf32>
    tpu.vector_store %arg12[%c5, %c0_38, %c0_39], %191 {strides = array<i32>} : memref<8x2x64xf32, #tpu.memory_space<vmem>>, vector<1x2x64xf32>,
    %192 = vector.extract_strided_slice %5 {offsets = [12, 0], sizes = [2, 256], strides = [1, 1]} : vector<16x256xf32> to vector<2x256xf32>
    %193 = arith.truncf %188 : vector<2x64xf32> to vector<2x64xbf16>
    %cst_40 = arith.constant dense<0.000000e+00> : vector<2x256xf32>
    %194 = tpu.matmul %193, %6, %cst_40 {dimension_numbers = #tpu.dot_dimension_numbers<[1], [0], [0], [1], [0, 0, 1, 1], [], []>} : vector<2x64xbf16>, vector<64x256xbf16>, vector<2x256xf32> -> vector<2x256xf32>
    %195 = arith.addf %192, %194 : vector<2x256xf32>
    %196 = vector.extract_strided_slice %195 {offsets = [0, 0], sizes = [2, 128], strides = [1, 1]} : vector<2x256xf32> to vector<2x128xf32>
    %197 = arith.negf %196 : vector<2x128xf32>
    %198 = math.exp %197 : vector<2x128xf32>
    %cst_41 = arith.constant 1.000000e+00 : f32
    %199 = vector.broadcast %cst_41 : f32 to vector<2x128xf32>
    %200 = arith.addf %199, %198 : vector<2x128xf32>
    %201 = arith.divf %199, %200 : vector<2x128xf32>
    %202 = vector.extract_strided_slice %195 {offsets = [0, 128], sizes = [2, 128], strides = [1, 1]} : vector<2x256xf32> to vector<2x128xf32>
    %203 = math.tanh %202 : vector<2x128xf32>
    %204 = arith.negf %202 : vector<2x128xf32>
    %205 = math.exp %204 : vector<2x128xf32>
    %cst_42 = arith.constant 1.000000e+00 : f32
    %206 = vector.broadcast %cst_42 : f32 to vector<2x128xf32>
    %207 = arith.addf %206, %205 : vector<2x128xf32>
    %208 = arith.divf %206, %207 : vector<2x128xf32>
    %209 = arith.select %9, %203, %208 : vector<2x128xi1>, vector<2x128xf32>
    %210 = vector.extract_strided_slice %201 {offsets = [0, 64], sizes = [2, 64], strides = [1, 1]} : vector<2x128xf32> to vector<2x64xf32>
    %211 = arith.mulf %210, %185 : vector<2x64xf32>
    %212 = vector.extract_strided_slice %201 {offsets = [0, 0], sizes = [2, 64], strides = [1, 1]} : vector<2x128xf32> to vector<2x64xf32>
    %213 = vector.extract_strided_slice %209 {offsets = [0, 0], sizes = [2, 64], strides = [1, 1]} : vector<2x128xf32> to vector<2x64xf32>
    %214 = arith.mulf %212, %213 : vector<2x64xf32>
    %215 = arith.addf %211, %214 : vector<2x64xf32>
    %216 = vector.extract_strided_slice %209 {offsets = [0, 64], sizes = [2, 64], strides = [1, 1]} : vector<2x128xf32> to vector<2x64xf32>
    %217 = math.tanh %215 : vector<2x64xf32>
    %218 = arith.mulf %216, %217 : vector<2x64xf32>
    %c6 = arith.constant 6 : index
    %c0_43 = arith.constant 0 : index
    %c0_44 = arith.constant 0 : index
    %219 = vector.load %arg12[%c6, %c0_43, %c0_44] : memref<8x2x64xf32, #tpu.memory_space<vmem>>, vector<1x2x64xf32>
    %220 = vector.shape_cast %219 : vector<1x2x64xf32> to vector<2x64xf32>
    %221 = vector.shape_cast %218 : vector<2x64xf32> to vector<1x2x64xf32>
    tpu.vector_store %arg12[%c6, %c0_43, %c0_44], %221 {strides = array<i32>} : memref<8x2x64xf32, #tpu.memory_space<vmem>>, vector<1x2x64xf32>,
    %222 = vector.extract_strided_slice %5 {offsets = [14, 0], sizes = [2, 256], strides = [1, 1]} : vector<16x256xf32> to vector<2x256xf32>
    %223 = arith.truncf %218 : vector<2x64xf32> to vector<2x64xbf16>
    %cst_45 = arith.constant dense<0.000000e+00> : vector<2x256xf32>
    %224 = tpu.matmul %223, %6, %cst_45 {dimension_numbers = #tpu.dot_dimension_numbers<[1], [0], [0], [1], [0, 0, 1, 1], [], []>} : vector<2x64xbf16>, vector<64x256xbf16>, vector<2x256xf32> -> vector<2x256xf32>
    %225 = arith.addf %222, %224 : vector<2x256xf32>
    %226 = vector.extract_strided_slice %225 {offsets = [0, 0], sizes = [2, 128], strides = [1, 1]} : vector<2x256xf32> to vector<2x128xf32>
    %227 = arith.negf %226 : vector<2x128xf32>
    %228 = math.exp %227 : vector<2x128xf32>
    %cst_46 = arith.constant 1.000000e+00 : f32
    %229 = vector.broadcast %cst_46 : f32 to vector<2x128xf32>
    %230 = arith.addf %229, %228 : vector<2x128xf32>
    %231 = arith.divf %229, %230 : vector<2x128xf32>
    %232 = vector.extract_strided_slice %225 {offsets = [0, 128], sizes = [2, 128], strides = [1, 1]} : vector<2x256xf32> to vector<2x128xf32>
    %233 = math.tanh %232 : vector<2x128xf32>
    %234 = arith.negf %232 : vector<2x128xf32>
    %235 = math.exp %234 : vector<2x128xf32>
    %cst_47 = arith.constant 1.000000e+00 : f32
    %236 = vector.broadcast %cst_47 : f32 to vector<2x128xf32>
    %237 = arith.addf %236, %235 : vector<2x128xf32>
    %238 = arith.divf %236, %237 : vector<2x128xf32>
    %239 = arith.select %9, %233, %238 : vector<2x128xi1>, vector<2x128xf32>
    %240 = vector.extract_strided_slice %231 {offsets = [0, 64], sizes = [2, 64], strides = [1, 1]} : vector<2x128xf32> to vector<2x64xf32>
    %241 = arith.mulf %240, %215 : vector<2x64xf32>
    %242 = vector.extract_strided_slice %231 {offsets = [0, 0], sizes = [2, 64], strides = [1, 1]} : vector<2x128xf32> to vector<2x64xf32>
    %243 = vector.extract_strided_slice %239 {offsets = [0, 0], sizes = [2, 64], strides = [1, 1]} : vector<2x128xf32> to vector<2x64xf32>
    %244 = arith.mulf %242, %243 : vector<2x64xf32>
    %245 = arith.addf %241, %244 : vector<2x64xf32>
    %246 = vector.extract_strided_slice %239 {offsets = [0, 64], sizes = [2, 64], strides = [1, 1]} : vector<2x128xf32> to vector<2x64xf32>
    %247 = math.tanh %245 : vector<2x64xf32>
    %248 = arith.mulf %246, %247 : vector<2x64xf32>
    %c7 = arith.constant 7 : index
    %c0_48 = arith.constant 0 : index
    %c0_49 = arith.constant 0 : index
    %249 = vector.load %arg12[%c7, %c0_48, %c0_49] : memref<8x2x64xf32, #tpu.memory_space<vmem>>, vector<1x2x64xf32>
    %250 = vector.shape_cast %249 : vector<1x2x64xf32> to vector<2x64xf32>
    %251 = vector.shape_cast %248 : vector<2x64xf32> to vector<1x2x64xf32>
    tpu.vector_store %arg12[%c7, %c0_48, %c0_49], %251 {strides = array<i32>} : memref<8x2x64xf32, #tpu.memory_space<vmem>>, vector<1x2x64xf32>,
    %c0_50 = arith.constant 0 : index
    %252 = memref.load %arg2[%c0_50] : memref<2xi32, #tpu.memory_space<smem>>
    %c0_51 = arith.constant 0 : index
    %c1_52 = arith.constant 1 : index
    %253 = memref.load %arg1[%c0_51, %c1_52] : memref<2x4xi32, #tpu.memory_space<smem>>
    %c0_53 = arith.constant 0 : index
    %c0_54 = arith.constant 0 : index
    %254 = memref.load %arg1[%c0_53, %c0_54] : memref<2x4xi32, #tpu.memory_space<smem>>
    %c0_i32 = arith.constant 0 : i32
    %c7_i32 = arith.constant 7 : i32
    %255 = arith.maxsi %c0_i32, %253 : i32
    %256 = arith.minsi %c7_i32, %255 : i32
    %c1_i32 = arith.constant 1 : i32
    %257 = arith.subi %252, %c1_i32 : i32
    %258 = arith.subi %257, %254 : i32
    %c0_i32_55 = arith.constant 0 : i32
    %c7_i32_56 = arith.constant 7 : i32
    %259 = arith.maxsi %c0_i32_55, %258 : i32
    %260 = arith.minsi %c7_i32_56, %259 : i32
    %261 = arith.index_cast %256 : i32 to index
    %c0_57 = arith.constant 0 : index
    %c0_58 = arith.constant 0 : index
    %262 = vector.load %arg12[%261, %c0_57, %c0_58] : memref<8x2x64xf32, #tpu.memory_space<vmem>>, vector<1x2x64xf32>
    %263 = vector.shape_cast %262 : vector<1x2x64xf32> to vector<2x64xf32>
    %264 = vector.extract_strided_slice %263 {offsets = [0, 0], sizes = [1, 32], strides = [1, 1]} : vector<2x64xf32> to vector<1x32xf32>
    %265 = arith.index_cast %260 : i32 to index
    %c0_59 = arith.constant 0 : index
    %c0_60 = arith.constant 0 : index
    %266 = vector.load %arg12[%265, %c0_59, %c0_60] : memref<8x2x64xf32, #tpu.memory_space<vmem>>, vector<1x2x64xf32>
    %267 = vector.shape_cast %266 : vector<1x2x64xf32> to vector<2x64xf32>
    %268 = vector.extract_strided_slice %267 {offsets = [0, 32], sizes = [1, 32], strides = [1, 1]} : vector<2x64xf32> to vector<1x32xf32>
    %269 = arith.cmpi slt, %253, %252 : i32
    %270 = arith.extui %269 : i1 to i32
    %271 = arith.sitofp %270 : i32 to f32
    %272 = vector.broadcast %271 : f32 to vector<1x32xf32>
    %273 = arith.mulf %264, %272 : vector<1x32xf32>
    %274 = arith.cmpi slt, %254, %252 : i32
    %275 = arith.extui %274 : i1 to i32
    %276 = arith.sitofp %275 : i32 to f32
    %277 = vector.broadcast %276 : f32 to vector<1x32xf32>
    %278 = arith.mulf %268, %277 : vector<1x32xf32>
    %279 = tpu.concatenate %273, %278 in 1 : vector<1x32xf32>, vector<1x32xf32> -> vector<1x64xf32>
    %c0_61 = arith.constant 0 : index
    %c2_62 = arith.constant 2 : index
    %280 = memref.load %arg1[%c0_61, %c2_62] : memref<2x4xi32, #tpu.memory_space<smem>>
    %c0_63 = arith.constant 0 : index
    %c1_64 = arith.constant 1 : index
    %281 = memref.load %arg1[%c0_63, %c1_64] : memref<2x4xi32, #tpu.memory_space<smem>>
    %c0_i32_65 = arith.constant 0 : i32
    %c7_i32_66 = arith.constant 7 : i32
    %282 = arith.maxsi %c0_i32_65, %280 : i32
    %283 = arith.minsi %c7_i32_66, %282 : i32
    %c1_i32_67 = arith.constant 1 : i32
    %284 = arith.subi %252, %c1_i32_67 : i32
    %285 = arith.subi %284, %281 : i32
    %c0_i32_68 = arith.constant 0 : i32
    %c7_i32_69 = arith.constant 7 : i32
    %286 = arith.maxsi %c0_i32_68, %285 : i32
    %287 = arith.minsi %c7_i32_69, %286 : i32
    %288 = arith.index_cast %283 : i32 to index
    %c0_70 = arith.constant 0 : index
    %c0_71 = arith.constant 0 : index
    %289 = vector.load %arg12[%288, %c0_70, %c0_71] : memref<8x2x64xf32, #tpu.memory_space<vmem>>, vector<1x2x64xf32>
    %290 = vector.shape_cast %289 : vector<1x2x64xf32> to vector<2x64xf32>
    %291 = vector.extract_strided_slice %290 {offsets = [0, 0], sizes = [1, 32], strides = [1, 1]} : vector<2x64xf32> to vector<1x32xf32>
    %292 = arith.index_cast %287 : i32 to index
    %c0_72 = arith.constant 0 : index
    %c0_73 = arith.constant 0 : index
    %293 = vector.load %arg12[%292, %c0_72, %c0_73] : memref<8x2x64xf32, #tpu.memory_space<vmem>>, vector<1x2x64xf32>
    %294 = vector.shape_cast %293 : vector<1x2x64xf32> to vector<2x64xf32>
    %295 = vector.extract_strided_slice %294 {offsets = [0, 32], sizes = [1, 32], strides = [1, 1]} : vector<2x64xf32> to vector<1x32xf32>
    %296 = arith.cmpi slt, %280, %252 : i32
    %297 = arith.extui %296 : i1 to i32
    %298 = arith.sitofp %297 : i32 to f32
    %299 = vector.broadcast %298 : f32 to vector<1x32xf32>
    %300 = arith.mulf %291, %299 : vector<1x32xf32>
    %301 = arith.cmpi slt, %281, %252 : i32
    %302 = arith.extui %301 : i1 to i32
    %303 = arith.sitofp %302 : i32 to f32
    %304 = vector.broadcast %303 : f32 to vector<1x32xf32>
    %305 = arith.mulf %295, %304 : vector<1x32xf32>
    %306 = tpu.concatenate %300, %305 in 1 : vector<1x32xf32>, vector<1x32xf32> -> vector<1x64xf32>
    %c0_74 = arith.constant 0 : index
    %c3_75 = arith.constant 3 : index
    %307 = memref.load %arg1[%c0_74, %c3_75] : memref<2x4xi32, #tpu.memory_space<smem>>
    %c0_76 = arith.constant 0 : index
    %c2_77 = arith.constant 2 : index
    %308 = memref.load %arg1[%c0_76, %c2_77] : memref<2x4xi32, #tpu.memory_space<smem>>
    %c0_i32_78 = arith.constant 0 : i32
    %c7_i32_79 = arith.constant 7 : i32
    %309 = arith.maxsi %c0_i32_78, %307 : i32
    %310 = arith.minsi %c7_i32_79, %309 : i32
    %c1_i32_80 = arith.constant 1 : i32
    %311 = arith.subi %252, %c1_i32_80 : i32
    %312 = arith.subi %311, %308 : i32
    %c0_i32_81 = arith.constant 0 : i32
    %c7_i32_82 = arith.constant 7 : i32
    %313 = arith.maxsi %c0_i32_81, %312 : i32
    %314 = arith.minsi %c7_i32_82, %313 : i32
    %315 = arith.index_cast %310 : i32 to index
    %c0_83 = arith.constant 0 : index
    %c0_84 = arith.constant 0 : index
    %316 = vector.load %arg12[%315, %c0_83, %c0_84] : memref<8x2x64xf32, #tpu.memory_space<vmem>>, vector<1x2x64xf32>
    %317 = vector.shape_cast %316 : vector<1x2x64xf32> to vector<2x64xf32>
    %318 = vector.extract_strided_slice %317 {offsets = [0, 0], sizes = [1, 32], strides = [1, 1]} : vector<2x64xf32> to vector<1x32xf32>
    %319 = arith.index_cast %314 : i32 to index
    %c0_85 = arith.constant 0 : index
    %c0_86 = arith.constant 0 : index
    %320 = vector.load %arg12[%319, %c0_85, %c0_86] : memref<8x2x64xf32, #tpu.memory_space<vmem>>, vector<1x2x64xf32>
    %321 = vector.shape_cast %320 : vector<1x2x64xf32> to vector<2x64xf32>
    %322 = vector.extract_strided_slice %321 {offsets = [0, 32], sizes = [1, 32], strides = [1, 1]} : vector<2x64xf32> to vector<1x32xf32>
    %323 = arith.cmpi slt, %307, %252 : i32
    %324 = arith.extui %323 : i1 to i32
    %325 = arith.sitofp %324 : i32 to f32
    %326 = vector.broadcast %325 : f32 to vector<1x32xf32>
    %327 = arith.mulf %318, %326 : vector<1x32xf32>
    %328 = arith.cmpi slt, %308, %252 : i32
    %329 = arith.extui %328 : i1 to i32
    %330 = arith.sitofp %329 : i32 to f32
    %331 = vector.broadcast %330 : f32 to vector<1x32xf32>
    %332 = arith.mulf %322, %331 : vector<1x32xf32>
    %333 = tpu.concatenate %327, %332 in 1 : vector<1x32xf32>, vector<1x32xf32> -> vector<1x64xf32>
    %c1_87 = arith.constant 1 : index
    %334 = memref.load %arg2[%c1_87] : memref<2xi32, #tpu.memory_space<smem>>
    %c1_88 = arith.constant 1 : index
    %c1_89 = arith.constant 1 : index
    %335 = memref.load %arg1[%c1_88, %c1_89] : memref<2x4xi32, #tpu.memory_space<smem>>
    %c1_90 = arith.constant 1 : index
    %c0_91 = arith.constant 0 : index
    %336 = memref.load %arg1[%c1_90, %c0_91] : memref<2x4xi32, #tpu.memory_space<smem>>
    %c0_i32_92 = arith.constant 0 : i32
    %c7_i32_93 = arith.constant 7 : i32
    %337 = arith.maxsi %c0_i32_92, %335 : i32
    %338 = arith.minsi %c7_i32_93, %337 : i32
    %c1_i32_94 = arith.constant 1 : i32
    %339 = arith.subi %334, %c1_i32_94 : i32
    %340 = arith.subi %339, %336 : i32
    %c0_i32_95 = arith.constant 0 : i32
    %c7_i32_96 = arith.constant 7 : i32
    %341 = arith.maxsi %c0_i32_95, %340 : i32
    %342 = arith.minsi %c7_i32_96, %341 : i32
    %343 = arith.index_cast %338 : i32 to index
    %c0_97 = arith.constant 0 : index
    %c0_98 = arith.constant 0 : index
    %344 = vector.load %arg12[%343, %c0_97, %c0_98] : memref<8x2x64xf32, #tpu.memory_space<vmem>>, vector<1x2x64xf32>
    %345 = vector.shape_cast %344 : vector<1x2x64xf32> to vector<2x64xf32>
    %346 = vector.extract_strided_slice %345 {offsets = [1, 0], sizes = [1, 32], strides = [1, 1]} : vector<2x64xf32> to vector<1x32xf32>
    %347 = arith.index_cast %342 : i32 to index
    %c0_99 = arith.constant 0 : index
    %c0_100 = arith.constant 0 : index
    %348 = vector.load %arg12[%347, %c0_99, %c0_100] : memref<8x2x64xf32, #tpu.memory_space<vmem>>, vector<1x2x64xf32>
    %349 = vector.shape_cast %348 : vector<1x2x64xf32> to vector<2x64xf32>
    %350 = vector.extract_strided_slice %349 {offsets = [1, 32], sizes = [1, 32], strides = [1, 1]} : vector<2x64xf32> to vector<1x32xf32>
    %351 = arith.cmpi slt, %335, %334 : i32
    %352 = arith.extui %351 : i1 to i32
    %353 = arith.sitofp %352 : i32 to f32
    %354 = vector.broadcast %353 : f32 to vector<1x32xf32>
    %355 = arith.mulf %346, %354 : vector<1x32xf32>
    %356 = arith.cmpi slt, %336, %334 : i32
    %357 = arith.extui %356 : i1 to i32
    %358 = arith.sitofp %357 : i32 to f32
    %359 = vector.broadcast %358 : f32 to vector<1x32xf32>
    %360 = arith.mulf %350, %359 : vector<1x32xf32>
    %361 = tpu.concatenate %355, %360 in 1 : vector<1x32xf32>, vector<1x32xf32> -> vector<1x64xf32>
    %c1_101 = arith.constant 1 : index
    %c2_102 = arith.constant 2 : index
    %362 = memref.load %arg1[%c1_101, %c2_102] : memref<2x4xi32, #tpu.memory_space<smem>>
    %c1_103 = arith.constant 1 : index
    %c1_104 = arith.constant 1 : index
    %363 = memref.load %arg1[%c1_103, %c1_104] : memref<2x4xi32, #tpu.memory_space<smem>>
    %c0_i32_105 = arith.constant 0 : i32
    %c7_i32_106 = arith.constant 7 : i32
    %364 = arith.maxsi %c0_i32_105, %362 : i32
    %365 = arith.minsi %c7_i32_106, %364 : i32
    %c1_i32_107 = arith.constant 1 : i32
    %366 = arith.subi %334, %c1_i32_107 : i32
    %367 = arith.subi %366, %363 : i32
    %c0_i32_108 = arith.constant 0 : i32
    %c7_i32_109 = arith.constant 7 : i32
    %368 = arith.maxsi %c0_i32_108, %367 : i32
    %369 = arith.minsi %c7_i32_109, %368 : i32
    %370 = arith.index_cast %365 : i32 to index
    %c0_110 = arith.constant 0 : index
    %c0_111 = arith.constant 0 : index
    %371 = vector.load %arg12[%370, %c0_110, %c0_111] : memref<8x2x64xf32, #tpu.memory_space<vmem>>, vector<1x2x64xf32>
    %372 = vector.shape_cast %371 : vector<1x2x64xf32> to vector<2x64xf32>
    %373 = vector.extract_strided_slice %372 {offsets = [1, 0], sizes = [1, 32], strides = [1, 1]} : vector<2x64xf32> to vector<1x32xf32>
    %374 = arith.index_cast %369 : i32 to index
    %c0_112 = arith.constant 0 : index
    %c0_113 = arith.constant 0 : index
    %375 = vector.load %arg12[%374, %c0_112, %c0_113] : memref<8x2x64xf32, #tpu.memory_space<vmem>>, vector<1x2x64xf32>
    %376 = vector.shape_cast %375 : vector<1x2x64xf32> to vector<2x64xf32>
    %377 = vector.extract_strided_slice %376 {offsets = [1, 32], sizes = [1, 32], strides = [1, 1]} : vector<2x64xf32> to vector<1x32xf32>
    %378 = arith.cmpi slt, %362, %334 : i32
    %379 = arith.extui %378 : i1 to i32
    %380 = arith.sitofp %379 : i32 to f32
    %381 = vector.broadcast %380 : f32 to vector<1x32xf32>
    %382 = arith.mulf %373, %381 : vector<1x32xf32>
    %383 = arith.cmpi slt, %363, %334 : i32
    %384 = arith.extui %383 : i1 to i32
    %385 = arith.sitofp %384 : i32 to f32
    %386 = vector.broadcast %385 : f32 to vector<1x32xf32>
    %387 = arith.mulf %377, %386 : vector<1x32xf32>
    %388 = tpu.concatenate %382, %387 in 1 : vector<1x32xf32>, vector<1x32xf32> -> vector<1x64xf32>
    %c1_114 = arith.constant 1 : index
    %c3_115 = arith.constant 3 : index
    %389 = memref.load %arg1[%c1_114, %c3_115] : memref<2x4xi32, #tpu.memory_space<smem>>
    %c1_116 = arith.constant 1 : index
    %c2_117 = arith.constant 2 : index
    %390 = memref.load %arg1[%c1_116, %c2_117] : memref<2x4xi32, #tpu.memory_space<smem>>
    %c0_i32_118 = arith.constant 0 : i32
    %c7_i32_119 = arith.constant 7 : i32
    %391 = arith.maxsi %c0_i32_118, %389 : i32
    %392 = arith.minsi %c7_i32_119, %391 : i32
    %c1_i32_120 = arith.constant 1 : i32
    %393 = arith.subi %334, %c1_i32_120 : i32
    %394 = arith.subi %393, %390 : i32
    %c0_i32_121 = arith.constant 0 : i32
    %c7_i32_122 = arith.constant 7 : i32
    %395 = arith.maxsi %c0_i32_121, %394 : i32
    %396 = arith.minsi %c7_i32_122, %395 : i32
    %397 = arith.index_cast %392 : i32 to index
    %c0_123 = arith.constant 0 : index
    %c0_124 = arith.constant 0 : index
    %398 = vector.load %arg12[%397, %c0_123, %c0_124] : memref<8x2x64xf32, #tpu.memory_space<vmem>>, vector<1x2x64xf32>
    %399 = vector.shape_cast %398 : vector<1x2x64xf32> to vector<2x64xf32>
    %400 = vector.extract_strided_slice %399 {offsets = [1, 0], sizes = [1, 32], strides = [1, 1]} : vector<2x64xf32> to vector<1x32xf32>
    %401 = arith.index_cast %396 : i32 to index
    %c0_125 = arith.constant 0 : index
    %c0_126 = arith.constant 0 : index
    %402 = vector.load %arg12[%401, %c0_125, %c0_126] : memref<8x2x64xf32, #tpu.memory_space<vmem>>, vector<1x2x64xf32>
    %403 = vector.shape_cast %402 : vector<1x2x64xf32> to vector<2x64xf32>
    %404 = vector.extract_strided_slice %403 {offsets = [1, 32], sizes = [1, 32], strides = [1, 1]} : vector<2x64xf32> to vector<1x32xf32>
    %405 = arith.cmpi slt, %389, %334 : i32
    %406 = arith.extui %405 : i1 to i32
    %407 = arith.sitofp %406 : i32 to f32
    %408 = vector.broadcast %407 : f32 to vector<1x32xf32>
    %409 = arith.mulf %400, %408 : vector<1x32xf32>
    %410 = arith.cmpi slt, %390, %334 : i32
    %411 = arith.extui %410 : i1 to i32
    %412 = arith.sitofp %411 : i32 to f32
    %413 = vector.broadcast %412 : f32 to vector<1x32xf32>
    %414 = arith.mulf %404, %413 : vector<1x32xf32>
    %415 = tpu.concatenate %409, %414 in 1 : vector<1x32xf32>, vector<1x32xf32> -> vector<1x64xf32>
    %cst_127 = arith.constant 0.000000e+00 : f32
    %416 = vector.broadcast %cst_127 : f32 to vector<2x64xf32>
    %417 = tpu.concatenate %279, %306, %333, %361, %388, %415, %416 in 0 : vector<1x64xf32>, vector<1x64xf32>, vector<1x64xf32>, vector<1x64xf32>, vector<1x64xf32>, vector<1x64xf32>, vector<2x64xf32> -> vector<8x64xf32>
    %418 = arith.truncf %417 : vector<8x64xf32> to vector<8x64xbf16>
    %c0_128 = arith.constant 0 : index
    %c0_129 = arith.constant 0 : index
    %419 = vector.load %arg7[%c0_128, %c0_129] : memref<64x32xbf16, #tpu.memory_space<vmem>>, vector<64x32xbf16>
    %cst_130 = arith.constant dense<0.000000e+00> : vector<8x32xf32>
    %420 = tpu.matmul %418, %419, %cst_130 {dimension_numbers = #tpu.dot_dimension_numbers<[1], [0], [0], [1], [0, 0, 1, 1], [], []>} : vector<8x64xbf16>, vector<64x32xbf16>, vector<8x32xf32> -> vector<8x32xf32>
    %c0_131 = arith.constant 0 : index
    %c0_132 = arith.constant 0 : index
    %421 = vector.load %arg8[%c0_131, %c0_132] : memref<1x32xf32, #tpu.memory_space<vmem>>, vector<1x32xf32>
    %422 = vector.broadcast %421 : vector<1x32xf32> to vector<8x32xf32>
    %423 = arith.addf %420, %422 : vector<8x32xf32>
    %cst_133 = arith.constant 0.000000e+00 : f32
    %424 = vector.broadcast %cst_133 : f32 to vector<8x32xf32>
    %425 = arith.maximumf %423, %424 : vector<8x32xf32>
    %426 = arith.truncf %425 : vector<8x32xf32> to vector<8x32xbf16>
    %c0_134 = arith.constant 0 : index
    %c0_135 = arith.constant 0 : index
    %427 = vector.load %arg9[%c0_134, %c0_135] : memref<32x8xbf16, #tpu.memory_space<vmem>>, vector<32x8xbf16>
    %cst_136 = arith.constant dense<0.000000e+00> : vector<8x8xf32>
    %428 = tpu.matmul %426, %427, %cst_136 {dimension_numbers = #tpu.dot_dimension_numbers<[1], [0], [0], [1], [0, 0, 1, 1], [], []>} : vector<8x32xbf16>, vector<32x8xbf16>, vector<8x8xf32> -> vector<8x8xf32>
    %c0_137 = arith.constant 0 : index
    %c0_138 = arith.constant 0 : index
    %429 = vector.load %arg10[%c0_137, %c0_138] : memref<1x8xf32, #tpu.memory_space<vmem>>, vector<1x8xf32>
    %430 = vector.broadcast %429 : vector<1x8xf32> to vector<8x8xf32>
    %431 = arith.addf %428, %430 : vector<8x8xf32>
    %cst_139 = arith.constant 0.000000e+00 : f32
    %432 = vector.broadcast %cst_139 : f32 to vector<8x120xf32>
    %433 = tpu.concatenate %431, %432 in 1 : vector<8x8xf32>, vector<8x120xf32> -> vector<8x128xf32>
    %c0_140 = arith.constant 0 : index
    %c0_141 = arith.constant 0 : index
    %434 = vector.load %arg11[%c0_140, %c0_141] : memref<8x128xf32, #tpu.memory_space<vmem>>, vector<8x128xf32>
    tpu.vector_store %arg11[%c0_140, %c0_141], %433 {strides = array<i32>} : memref<8x128xf32, #tpu.memory_space<vmem>>, vector<8x128xf32>,
    return
  }
  func.func @transform_0(%arg0: i32, %arg1: memref<2x4xi32, #tpu.memory_space<smem>>, %arg2: memref<2xi32, #tpu.memory_space<smem>>) -> (i32, i32) {
    %c0_i32 = arith.constant 0 : i32
    %c0_i32_0 = arith.constant 0 : i32
    %c0_i32_1 = arith.constant 0 : i32
    return %c0_i32, %c0_i32_0 : i32, i32
  }
  func.func @transform_1(%arg0: i32, %arg1: memref<2x4xi32, #tpu.memory_space<smem>>, %arg2: memref<2xi32, #tpu.memory_space<smem>>) -> (i32, i32) {
    %c0_i32 = arith.constant 0 : i32
    %c0_i32_0 = arith.constant 0 : i32
    %c0_i32_1 = arith.constant 0 : i32
    return %c0_i32, %c0_i32_0 : i32, i32
  }
  func.func @transform_2(%arg0: i32, %arg1: memref<2x4xi32, #tpu.memory_space<smem>>, %arg2: memref<2xi32, #tpu.memory_space<smem>>) -> (i32, i32) {
    %c0_i32 = arith.constant 0 : i32
    %c0_i32_0 = arith.constant 0 : i32
    %c0_i32_1 = arith.constant 0 : i32
    return %c0_i32, %c0_i32_0 : i32, i32
  }
  func.func @transform_3(%arg0: i32, %arg1: memref<2x4xi32, #tpu.memory_space<smem>>, %arg2: memref<2xi32, #tpu.memory_space<smem>>) -> (i32, i32) {
    %c0_i32 = arith.constant 0 : i32
    %c0_i32_0 = arith.constant 0 : i32
    %c0_i32_1 = arith.constant 0 : i32
    return %c0_i32, %c0_i32_0 : i32, i32
  }
  func.func @transform_4(%arg0: i32, %arg1: memref<2x4xi32, #tpu.memory_space<smem>>, %arg2: memref<2xi32, #tpu.memory_space<smem>>) -> (i32, i32) {
    %c0_i32 = arith.constant 0 : i32
    %c0_i32_0 = arith.constant 0 : i32
    %c0_i32_1 = arith.constant 0 : i32
    return %c0_i32, %c0_i32_0 : i32, i32
  }
  func.func @transform_5(%arg0: i32, %arg1: memref<2x4xi32, #tpu.memory_space<smem>>, %arg2: memref<2xi32, #tpu.memory_space<smem>>) -> (i32, i32) {
    %c0_i32 = arith.constant 0 : i32
    %c0_i32_0 = arith.constant 0 : i32
    %c0_i32_1 = arith.constant 0 : i32
    return %c0_i32, %c0_i32_0 : i32, i32
  }
  func.func @transform_6(%arg0: i32, %arg1: memref<2x4xi32, #tpu.memory_space<smem>>, %arg2: memref<2xi32, #tpu.memory_space<smem>>) -> (i32, i32) {
    %c0_i32 = arith.constant 0 : i32
    %c0_i32_0 = arith.constant 0 : i32
    %c0_i32_1 = arith.constant 0 : i32
    return %c0_i32, %c0_i32_0 : i32, i32
  }
  func.func @transform_7(%arg0: i32, %arg1: memref<2x4xi32, #tpu.memory_space<smem>>, %arg2: memref<2xi32, #tpu.memory_space<smem>>) -> (i32, i32) {
    %c0_i32 = arith.constant 0 : i32
    %c0_i32_0 = arith.constant 0 : i32
    %c0_i32_1 = arith.constant 0 : i32
    return %c0_i32, %c0_i32_0 : i32, i32
  }
  func.func @transform_8(%arg0: i32, %arg1: memref<2x4xi32, #tpu.memory_space<smem>>, %arg2: memref<2xi32, #tpu.memory_space<smem>>) -> (i32, i32) {
    %c0_i32 = arith.constant 0 : i32
    %c0_i32_0 = arith.constant 0 : i32
    %c0_i32_1 = arith.constant 0 : i32
    return %c0_i32, %c0_i32_0 : i32, i32
  }
}

</mosaic_0001>

<llo_original>
// kernel: character_level_network_forward.1
$region0: #{character_level_network_forward.1}
  #allocation0 [shape = 'u32[]', space=smem, size = 0x4, offset = 0x4, fixed_abs, tag = 'smem constant byte address 0x4 - core index']
  #allocation1 [shape = 'u32[144,128]{1,0:T(1,128)}', space=vmem, size = 0x12000, scoped, tag = 'internal scratch']
  #allocation2 [shape = 'f32[8,2,64]{2,1,0:T(2,128)}', space=vmem, size = 0x2000, scoped, tag = 'scratch operand']
  #allocation3 [shape = 's32[1]{0}', space=sflag, size = 0x4, scoped, tag = 'scoped memory for character_level_network_forward.1']
  #allocation4 [shape = 'u8[1024]{0}', space=smem, size = 0x400, scoped, tag = 'prefetched SMEM operand 0']
  #allocation5 [shape = 'u8[512]{0}', space=smem, size = 0x200, scoped, tag = 'prefetched SMEM operand 1']
  %s0 = inlined_call_operand.vmem [shape: s32[2,4], index: 0, kind: input, shape index: {}]
  %s1 = inlined_call_operand.vmem [shape: s32[2], index: 1, kind: input, shape index: {}]
  %s2 = inlined_call_operand.vmem [shape: bf16[16,16], index: 2, kind: input, shape index: {}]
  %s3 = inlined_call_operand.vmem [shape: bf16[16,256], index: 3, kind: input, shape index: {}]
  %s4 = inlined_call_operand.vmem [shape: bf16[64,256], index: 4, kind: input, shape index: {}]
  %s5 = inlined_call_operand.vmem [shape: f32[1,256], index: 5, kind: input, shape index: {}]
  %s6 = inlined_call_operand.vmem [shape: bf16[64,32], index: 6, kind: input, shape index: {}]
  %s7 = inlined_call_operand.vmem [shape: f32[1,32], index: 7, kind: input, shape index: {}]
  %s8 = inlined_call_operand.vmem [shape: bf16[32,8], index: 8, kind: input, shape index: {}]
  %s9 = inlined_call_operand.vmem [shape: f32[1,8], index: 9, kind: input, shape index: {}]
  %s10 = inlined_call_operand.vmem [shape: f32[8,128], index: 10, kind: output, shape index: {}]
  %s11 = sld [smem:[#allocation0]]
  $region42: #{character_level_network_forward.1} parent=0
    _
  %s13 = ssub.s32 1, %s11
  %s14 = scalar_select 0, %s13, %s11
  %s15 = sshll.u32 %s0, 4
  %s16 = int_to_ptr.vmem [resolvable:$true] %s15
  %18 = dma.vmem_to_smem %s16, 32, [#allocation4], [#allocation3]
  %s19 = sshll.u32 %s1, 4
  %s20 = int_to_ptr.vmem [resolvable:$true] %s19
  %22 = dma.vmem_to_smem %s20, 16, [#allocation5], [#allocation3]
  %23 = dma.done [#allocation3], 48
  %24 = sfence
  // Predicated region
  $region2: #{character_level_network_forward.1} parent=0 // pred_check
    _
  $region3: #{character_level_network_forward.1} parent=0 // pred_check_branch
    %26 = sbr.rel (0) target = $region5
  $region4: #{character_level_network_forward.1} parent=0 // pred_region
    _
  $region5: #{character_level_network_forward.1} parent=0 // pred_fallthru
    _
  // Predicated region
  $region6: #{character_level_network_forward.1} parent=0 // pred_check
    _
  $region7: #{character_level_network_forward.1} parent=0 // pred_check_branch
    %28 = sbr.rel (0) target = $region9
  $region8: #{character_level_network_forward.1} parent=0 // pred_region
    _
  $region9: #{character_level_network_forward.1} parent=0 // pred_fallthru
    _
  // Predicated region
  $region10: #{character_level_network_forward.1} parent=0 // pred_check
    _
  $region11: #{character_level_network_forward.1} parent=0 // pred_check_branch
    %30 = sbr.rel (0) target = $region13
  $region12: #{character_level_network_forward.1} parent=0 // pred_region
    _
  $region13: #{character_level_network_forward.1} parent=0 // pred_fallthru
    _
  // Predicated region
  $region14: #{character_level_network_forward.1} parent=0 // pred_check
    _
  $region15: #{character_level_network_forward.1} parent=0 // pred_check_branch
    %32 = sbr.rel (0) target = $region17
  $region16: #{character_level_network_forward.1} parent=0 // pred_region
    _
  $region17: #{character_level_network_forward.1} parent=0 // pred_fallthru
    _
  // Predicated region
  $region18: #{character_level_network_forward.1} parent=0 // pred_check
    _
  $region19: #{character_level_network_forward.1} parent=0 // pred_check_branch
    %34 = sbr.rel (0) target = $region21
  $region20: #{character_level_network_forward.1} parent=0 // pred_region
    _
  $region21: #{character_level_network_forward.1} parent=0 // pred_fallthru
    _
  // Predicated region
  $region22: #{character_level_network_forward.1} parent=0 // pred_check
    _
  $region23: #{character_level_network_forward.1} parent=0 // pred_check_branch
    %36 = sbr.rel (0) target = $region25
  $region24: #{character_level_network_forward.1} parent=0 // pred_region
    _
  $region25: #{character_level_network_forward.1} parent=0 // pred_fallthru
    _
  // Predicated region
  $region26: #{character_level_network_forward.1} parent=0 // pred_check
    _
  $region27: #{character_level_network_forward.1} parent=0 // pred_check_branch
    %38 = sbr.rel (0) target = $region29
  $region28: #{character_level_network_forward.1} parent=0 // pred_region
    _
  $region29: #{character_level_network_forward.1} parent=0 // pred_fallthru
    _
  // Predicated region
  $region30: #{character_level_network_forward.1} parent=0 // pred_check
    _
  $region31: #{character_level_network_forward.1} parent=0 // pred_check_branch
    %40 = sbr.rel (0) target = $region33
  $region32: #{character_level_network_forward.1} parent=0 // pred_region
    _
  $region33: #{character_level_network_forward.1} parent=0 // pred_fallthru
    _
  %v42 = vld [vmem:[%s2] sm:$0xf]
  %v43 = vld [vmem:[%s2 + $0x4] sm:$0xf]
  %v44 = vld [vmem:[%s3] sm:$0xff]
  %v45 = vld [vmem:[%s3 + $0x8] sm:$0xff]
  %v46 = vld [vmem:[%s5] sm:$0x3]
  %v48 = vlaneseq
  %v49 = vshrl.u32 %v48, 7
  %v50 = vsub.s32 0, %v49
  %v51 = vrot.slane %v46, %v50
  %v52 = vlaneseq
  %v53 = vshrl.u32 %v52, 7
  %v54 = vsub.s32 1, %v53
  %v55 = vrot.slane %v46, %v54
  %v60 = vunpack.c.l.b16 %v42
  %v61 = vunpack.c.l.b16 %v43
  %v62 = vpack.c.b16 %v61, %v60
  %v65 = vunpack.c.l.b16 %v44
  %v66 = vunpack.c.h.b16 %v44
  %v67 = vunpack.c.l.b16 %v45
  %v68 = vunpack.c.h.b16 %v45
  %v69 = vpack.c.b16 %v67, %v65
  %v70 = vpack.c.b16 %v68, %v66
  %vm73 = vcmask 130048
  %v75 = vsel %vm73, %v62, 0
  %77 = vmatprep.subr.bf16.mxu0 0
  %78 = vmatpush1.bf16.msra.mxu0 0
  %79 = vmatprep.subr.bf16.mxu0 0
  %80 = vmatpush1.bf16.msra.mxu0 0
  %81 = vmatprep.subr.bf16.mxu0 0
  %82 = vmatpush1.bf16.msra.mxu0 0
  %83 = vmatprep.subr.bf16.mxu0 0
  %84 = vmatpush1.bf16.msra.mxu0 0
  %85 = vmatprep.subr.bf16.mxu0 0
  %86 = vmatpush1.bf16.msra.mxu0 0
  %87 = vmatprep.subr.bf16.mxu0 0
  %88 = vmatpush1.bf16.msra.mxu0 0
  %89 = vmatprep.subr.bf16.mxu0 0
  %90 = vmatpush1.bf16.msra.mxu0 0
  %91 = vmatprep.subr.bf16.mxu0 %v70
  %92 = vmatpush1.bf16.msra.mxu0 %v69
  %93 = vmatprep.subr.bf16.mxu0 0
  %94 = vmatpush2.bf16.msra.mxu0 0
  %95 = vmatprep.subr.bf16.mxu0 0
  %96 = vmatpush2.bf16.msra.mxu0 0
  %97 = vmatprep.subr.bf16.mxu0 0
  %98 = vmatpush2.bf16.msra.mxu0 0
  %99 = vmatprep.subr.bf16.mxu0 0
  %100 = vmatpush2.bf16.msra.mxu0 0
  %101 = vmatprep.subr.bf16.mxu0 0
  %102 = vmatpush2.bf16.msra.mxu0 0
  %103 = vmatprep.subr.bf16.mxu0 0
  %104 = vmatpush2.bf16.msra.mxu0 0
  %105 = vmatprep.subr.bf16.mxu0 0
  %106 = vmatpush2.bf16.msra.mxu0 0
  %107 = vmatprep.subr.bf16.mxu0 0
  %108 = vmatpush2.bf16.msra.mxu0 0
  %109 = vmatprep.mubr.bf16.mxu0 0
  %110 = vmatmul.mubr.bf16.gmra.mxu0 %v75
  %v111 = vpop.f32.mrf.mxu0
  %v112 = vadd.f32 %v51, %v111
  %v113 = vpop.f32.mrf.mxu0
  %v114 = vadd.f32 %v55, %v113
  %v115 = vpop.f32.mrf.mxu0
  %v116 = vadd.f32 %v51, %v115
  %v117 = vpop.f32.mrf.mxu0
  %v118 = vadd.f32 %v55, %v117
  %119 = vdwg.mxu0
  %v120 = vld [vmem:[%s4] sm:$0xff]
  %v121 = vld [vmem:[%s4 + $0x8] sm:$0xff]
  %v122 = vld [vmem:[%s4 + $0x10] sm:$0xff]
  %v123 = vld [vmem:[%s4 + $0x18] sm:$0xff]
  %v124 = vld [vmem:[%s4 + $0x20] sm:$0xff]
  %v125 = vld [vmem:[%s4 + $0x28] sm:$0xff]
  %v126 = vld [vmem:[%s4 + $0x30] sm:$0xff]
  %v127 = vld [vmem:[%s4 + $0x38] sm:$0xff]
  %v128 = vlaneseq
  %v129 = vand.u32 %v128, 127
  %vm130 = vcmp.lt.s32.totalorder %v129, 64
  %v139 = vunpack.c.l.b16 %v120
  %v140 = vunpack.c.h.b16 %v120
  %v141 = vunpack.c.l.b16 %v121
  %v142 = vunpack.c.h.b16 %v121
  %v143 = vunpack.c.l.b16 %v122
  %v144 = vunpack.c.h.b16 %v122
  %v145 = vunpack.c.l.b16 %v123
  %v146 = vunpack.c.h.b16 %v123
  %v147 = vunpack.c.l.b16 %v124
  %v148 = vunpack.c.h.b16 %v124
  %v149 = vunpack.c.l.b16 %v125
  %v150 = vunpack.c.h.b16 %v125
  %v151 = vunpack.c.l.b16 %v126
  %v152 = vunpack.c.h.b16 %v126
  %v153 = vunpack.c.l.b16 %v127
  %v154 = vunpack.c.h.b16 %v127
  %v155 = vpack.c.b16 %v141, %v139
  %v156 = vpack.c.b16 %v142, %v140
  %v157 = vpack.c.b16 %v145, %v143
  %v158 = vpack.c.b16 %v146, %v144
  %v159 = vpack.c.b16 %v149, %v147
  %v160 = vpack.c.b16 %v150, %v148
  %v161 = vpack.c.b16 %v153, %v151
  %v162 = vpack.c.b16 %v154, %v152
  %vm171 = vcmask 523264
  %v173 = vsel %vm171, 0, 0
  %175 = vmatprep.subr.bf16.mxu0 0
  %176 = vmatpush1.bf16.msra.mxu0 0
  %177 = vmatprep.subr.bf16.mxu0 0
  %178 = vmatpush1.bf16.msra.mxu0 0
  %179 = vmatprep.subr.bf16.mxu0 0
  %180 = vmatpush1.bf16.msra.mxu0 0
  %181 = vmatprep.subr.bf16.mxu0 0
  %182 = vmatpush1.bf16.msra.mxu0 0
  %183 = vmatprep.subr.bf16.mxu0 %v162
  %184 = vmatpush1.bf16.msra.mxu0 %v161
  %185 = vmatprep.subr.bf16.mxu0 %v160
  %186 = vmatpush1.bf16.msra.mxu0 %v159
  %187 = vmatprep.subr.bf16.mxu0 %v158
  %188 = vmatpush1.bf16.msra.mxu0 %v157
  %189 = vmatprep.subr.bf16.mxu0 %v156
  %190 = vmatpush1.bf16.msra.mxu0 %v155
  %191 = vmatprep.subr.bf16.mxu0 0
  %192 = vmatpush2.bf16.msra.mxu0 0
  %193 = vmatprep.subr.bf16.mxu0 0
  %194 = vmatpush2.bf16.msra.mxu0 0
  %195 = vmatprep.subr.bf16.mxu0 0
  %196 = vmatpush2.bf16.msra.mxu0 0
  %197 = vmatprep.subr.bf16.mxu0 0
  %198 = vmatpush2.bf16.msra.mxu0 0
  %199 = vmatprep.subr.bf16.mxu0 0
  %200 = vmatpush2.bf16.msra.mxu0 0
  %201 = vmatprep.subr.bf16.mxu0 0
  %202 = vmatpush2.bf16.msra.mxu0 0
  %203 = vmatprep.subr.bf16.mxu0 0
  %204 = vmatpush2.bf16.msra.mxu0 0
  %205 = vmatprep.subr.bf16.mxu0 0
  %206 = vmatpush2.bf16.msra.mxu0 0
  %207 = vmatprep.mubr.bf16.mxu0 0
  %208 = vmatmul.mubr.bf16.gmra.mxu0 %v173
  %v209 = vpop.f32.mrf.mxu0
  %v210 = vadd.f32 0.0, %v209
  %v211 = vpop.f32.mrf.mxu0
  %v212 = vadd.f32 0.0, %v211
  %v213 = vpop.f32.mrf.mxu0
  %v214 = vpop.f32.mrf.mxu0
  %215 = vdwg.mxu0
  %v216 = vadd.f32 %v112, %v210
  %v217 = vadd.f32 %v114, %v212
  %v218 = vxor.u32 %v216, 2147483648
  %v219 = vmul.f32 %v218, 1.442695
  %v220 = vpow.pop %v219
  %v221 = vadd.f32 %v220, 1.0
  %v222 = vrcp.pop %v221
  %v223 = vmul.f32 1.0, %v222
  %v224 = vtanh.pop %v217
  %v225 = vxor.u32 %v217, 2147483648
  %v226 = vmul.f32 %v225, 1.442695
  %v227 = vpow.pop %v226
  %v228 = vadd.f32 %v227, 1.0
  %v229 = vrcp.pop %v228
  %v230 = vmul.f32 1.0, %v229
  %v231 = vsel %vm130, %v224, %v230
  %v232 = vmul.f32 %v223, 0.0
  %v233 = vmul.f32 %v223, %v231
  %235 = vrot.lane.b32.xlu0 %v233, 64
  %v236 = vpop.permute.xlu0 %235
  %v238 = vadd.f32 %v232, %v236
  %v239 = vtanh.pop %v238
  %v240 = vmul.f32 %v231, %v239
  %242 = vrot.lane.b32.xlu0 %v240, 64
  %v243 = vpop.permute.xlu0 %242
  %vm245 = vcmask 517120
  %246 = vst.msk [vmem:[#allocation2] sm:$0x3] %vm245, %v243
  %v247 = vpack.c.bf16 %v240, %v240
  %249 = vrot.lane.b32.xlu0 %v247, 64
  %v250 = vpop.permute.xlu0 %249
  %v252 = vsel %vm171, %v250, 0
  %254 = vmatprep.subr.bf16.mxu0 0
  %255 = vmatpush1.bf16.msra.mxu0 0
  %256 = vmatprep.subr.bf16.mxu0 0
  %257 = vmatpush1.bf16.msra.mxu0 0
  %258 = vmatprep.subr.bf16.mxu0 0
  %259 = vmatpush1.bf16.msra.mxu0 0
  %260 = vmatprep.subr.bf16.mxu0 0
  %261 = vmatpush1.bf16.msra.mxu0 0
  %262 = vmatprep.subr.bf16.mxu0 %v162
  %263 = vmatpush1.bf16.msra.mxu0 %v161
  %264 = vmatprep.subr.bf16.mxu0 %v160
  %265 = vmatpush1.bf16.msra.mxu0 %v159
  %266 = vmatprep.subr.bf16.mxu0 %v158
  %267 = vmatpush1.bf16.msra.mxu0 %v157
  %268 = vmatprep.subr.bf16.mxu0 %v156
  %269 = vmatpush1.bf16.msra.mxu0 %v155
  %270 = vmatprep.subr.bf16.mxu0 0
  %271 = vmatpush2.bf16.msra.mxu0 0
  %272 = vmatprep.subr.bf16.mxu0 0
  %273 = vmatpush2.bf16.msra.mxu0 0
  %274 = vmatprep.subr.bf16.mxu0 0
  %275 = vmatpush2.bf16.msra.mxu0 0
  %276 = vmatprep.subr.bf16.mxu0 0
  %277 = vmatpush2.bf16.msra.mxu0 0
  %278 = vmatprep.subr.bf16.mxu0 0
  %279 = vmatpush2.bf16.msra.mxu0 0
  %280 = vmatprep.subr.bf16.mxu0 0
  %281 = vmatpush2.bf16.msra.mxu0 0
  %282 = vmatprep.subr.bf16.mxu0 0
  %283 = vmatpush2.bf16.msra.mxu0 0
  %284 = vmatprep.subr.bf16.mxu0 0
  %285 = vmatpush2.bf16.msra.mxu0 0
  %286 = vmatprep.mubr.bf16.mxu0 0
  %287 = vmatmul.mubr.bf16.gmra.mxu0 %v252
  %v288 = vpop.f32.mrf.mxu0
  %v289 = vadd.f32 0.0, %v288
  %v290 = vpop.f32.mrf.mxu0
  %v291 = vadd.f32 0.0, %v290
  %v292 = vpop.f32.mrf.mxu0
  %v293 = vpop.f32.mrf.mxu0
  %294 = vdwg.mxu0
  %v297 = vrot.slane %v289, 6
  %v298 = vrot.slane %v291, 6
  %v301 = vadd.f32 %v112, %v297
  %v302 = vadd.f32 %v114, %v298
  %v303 = vxor.u32 %v301, 2147483648
  %v304 = vmul.f32 %v303, 1.442695
  %v305 = vpow.pop %v304
  %v306 = vadd.f32 %v305, 1.0
  %v307 = vrcp.pop %v306
  %v308 = vmul.f32 1.0, %v307
  %v309 = vtanh.pop %v302
  %v310 = vxor.u32 %v302, 2147483648
  %v311 = vmul.f32 %v310, 1.442695
  %v312 = vpow.pop %v311
  %v313 = vadd.f32 %v312, 1.0
  %v314 = vrcp.pop %v313
  %v315 = vmul.f32 1.0, %v314
  %v316 = vsel %vm130, %v309, %v315
  %v318 = vrot.slane %v238, 6
  %v320 = vmul.f32 %v308, %v318
  %v321 = vmul.f32 %v308, %v316
  %323 = vrot.lane.b32.xlu0 %v321, 64
  %v324 = vpop.permute.xlu0 %323
  %v326 = vadd.f32 %v320, %v324
  %v327 = vtanh.pop %v326
  %v328 = vmul.f32 %v316, %v327
  %330 = vrot.lane.b32.xlu0 %v328, 64
  %v331 = vpop.permute.xlu0 %330
  %s333 = scalar_lea.vmem [#allocation2], 2
  %vm334 = vcmask 519170
  %335 = vst.msk [vmem:[%s333 - $0x2] sm:$0xc] %vm334, %v331
  %v336 = vpack.c.bf16 %v328, %v328
  %v338 = vrot.slane %v336, 1
  %339 = vrot.lane.b32.xlu0 %v338, 64
  %v340 = vpop.permute.xlu0 %339
  %v342 = vsel %vm171, %v340, 0
  %344 = vmatprep.subr.bf16.mxu0 0
  %345 = vmatpush1.bf16.msra.mxu0 0
  %346 = vmatprep.subr.bf16.mxu0 0
  %347 = vmatpush1.bf16.msra.mxu0 0
  %348 = vmatprep.subr.bf16.mxu0 0
  %349 = vmatpush1.bf16.msra.mxu0 0
  %350 = vmatprep.subr.bf16.mxu0 0
  %351 = vmatpush1.bf16.msra.mxu0 0
  %352 = vmatprep.subr.bf16.mxu0 %v162
  %353 = vmatpush1.bf16.msra.mxu0 %v161
  %354 = vmatprep.subr.bf16.mxu0 %v160
  %355 = vmatpush1.bf16.msra.mxu0 %v159
  %356 = vmatprep.subr.bf16.mxu0 %v158
  %357 = vmatpush1.bf16.msra.mxu0 %v157
  %358 = vmatprep.subr.bf16.mxu0 %v156
  %359 = vmatpush1.bf16.msra.mxu0 %v155
  %360 = vmatprep.subr.bf16.mxu0 0
  %361 = vmatpush2.bf16.msra.mxu0 0
  %362 = vmatprep.subr.bf16.mxu0 0
  %363 = vmatpush2.bf16.msra.mxu0 0
  %364 = vmatprep.subr.bf16.mxu0 0
  %365 = vmatpush2.bf16.msra.mxu0 0
  %366 = vmatprep.subr.bf16.mxu0 0
  %367 = vmatpush2.bf16.msra.mxu0 0
  %368 = vmatprep.subr.bf16.mxu0 0
  %369 = vmatpush2.bf16.msra.mxu0 0
  %370 = vmatprep.subr.bf16.mxu0 0
  %371 = vmatpush2.bf16.msra.mxu0 0
  %372 = vmatprep.subr.bf16.mxu0 0
  %373 = vmatpush2.bf16.msra.mxu0 0
  %374 = vmatprep.subr.bf16.mxu0 0
  %375 = vmatpush2.bf16.msra.mxu0 0
  %376 = vmatprep.mubr.bf16.mxu0 0
  %377 = vmatmul.mubr.bf16.gmra.mxu0 %v342
  %v378 = vpop.f32.mrf.mxu0
  %v379 = vadd.f32 0.0, %v378
  %v380 = vpop.f32.mrf.mxu0
  %v381 = vadd.f32 0.0, %v380
  %v382 = vpop.f32.mrf.mxu0
  %v383 = vpop.f32.mrf.mxu0
  %384 = vdwg.mxu0
  %v387 = vrot.slane %v379, 4
  %v388 = vrot.slane %v381, 4
  %v391 = vadd.f32 %v112, %v387
  %v392 = vadd.f32 %v114, %v388
  %v393 = vxor.u32 %v391, 2147483648
  %v394 = vmul.f32 %v393, 1.442695
  %v395 = vpow.pop %v394
  %v396 = vadd.f32 %v395, 1.0
  %v397 = vrcp.pop %v396
  %v398 = vmul.f32 1.0, %v397
  %v399 = vtanh.pop %v392
  %v400 = vxor.u32 %v392, 2147483648
  %v401 = vmul.f32 %v400, 1.442695
  %v402 = vpow.pop %v401
  %v403 = vadd.f32 %v402, 1.0
  %v404 = vrcp.pop %v403
  %v405 = vmul.f32 1.0, %v404
  %v406 = vsel %vm130, %v399, %v405
  %v408 = vrot.slane %v326, 6
  %v410 = vmul.f32 %v398, %v408
  %v411 = vmul.f32 %v398, %v406
  %413 = vrot.lane.b32.xlu0 %v411, 64
  %v414 = vpop.permute.xlu0 %413
  %v416 = vadd.f32 %v410, %v414
  %v417 = vtanh.pop %v416
  %v418 = vmul.f32 %v406, %v417
  %420 = vrot.lane.b32.xlu0 %v418, 64
  %v421 = vpop.permute.xlu0 %420
  %s423 = scalar_lea.vmem [#allocation2], 4
  %vm424 = vcmask 521220
  %425 = vst.msk [vmem:[%s423 - $0x4] sm:$0x30] %vm424, %v421
  %v426 = vpack.c.bf16 %v418, %v418
  %v428 = vrot.slane %v426, 2
  %429 = vrot.lane.b32.xlu0 %v428, 64
  %v430 = vpop.permute.xlu0 %429
  %v432 = vsel %vm171, %v430, 0
  %434 = vmatprep.subr.bf16.mxu0 0
  %435 = vmatpush1.bf16.msra.mxu0 0
  %436 = vmatprep.subr.bf16.mxu0 0
  %437 = vmatpush1.bf16.msra.mxu0 0
  %438 = vmatprep.subr.bf16.mxu0 0
  %439 = vmatpush1.bf16.msra.mxu0 0
  %440 = vmatprep.subr.bf16.mxu0 0
  %441 = vmatpush1.bf16.msra.mxu0 0
  %442 = vmatprep.subr.bf16.mxu0 %v162
  %443 = vmatpush1.bf16.msra.mxu0 %v161
  %444 = vmatprep.subr.bf16.mxu0 %v160
  %445 = vmatpush1.bf16.msra.mxu0 %v159
  %446 = vmatprep.subr.bf16.mxu0 %v158
  %447 = vmatpush1.bf16.msra.mxu0 %v157
  %448 = vmatprep.subr.bf16.mxu0 %v156
  %449 = vmatpush1.bf16.msra.mxu0 %v155
  %450 = vmatprep.subr.bf16.mxu0 0
  %451 = vmatpush2.bf16.msra.mxu0 0
  %452 = vmatprep.subr.bf16.mxu0 0
  %453 = vmatpush2.bf16.msra.mxu0 0
  %454 = vmatprep.subr.bf16.mxu0 0
  %455 = vmatpush2.bf16.msra.mxu0 0
  %456 = vmatprep.subr.bf16.mxu0 0
  %457 = vmatpush2.bf16.msra.mxu0 0
  %458 = vmatprep.subr.bf16.mxu0 0
  %459 = vmatpush2.bf16.msra.mxu0 0
  %460 = vmatprep.subr.bf16.mxu0 0
  %461 = vmatpush2.bf16.msra.mxu0 0
  %462 = vmatprep.subr.bf16.mxu0 0
  %463 = vmatpush2.bf16.msra.mxu0 0
  %464 = vmatprep.subr.bf16.mxu0 0
  %465 = vmatpush2.bf16.msra.mxu0 0
  %466 = vmatprep.mubr.bf16.mxu0 0
  %467 = vmatmul.mubr.bf16.gmra.mxu0 %v432
  %v468 = vpop.f32.mrf.mxu0
  %v469 = vadd.f32 0.0, %v468
  %v470 = vpop.f32.mrf.mxu0
  %v471 = vadd.f32 0.0, %v470
  %v472 = vpop.f32.mrf.mxu0
  %v473 = vpop.f32.mrf.mxu0
  %474 = vdwg.mxu0
  %v477 = vrot.slane %v469, 2
  %v478 = vrot.slane %v471, 2
  %v481 = vadd.f32 %v112, %v477
  %v482 = vadd.f32 %v114, %v478
  %v483 = vxor.u32 %v481, 2147483648
  %v484 = vmul.f32 %v483, 1.442695
  %v485 = vpow.pop %v484
  %v486 = vadd.f32 %v485, 1.0
  %v487 = vrcp.pop %v486
  %v488 = vmul.f32 1.0, %v487
  %v489 = vtanh.pop %v482
  %v490 = vxor.u32 %v482, 2147483648
  %v491 = vmul.f32 %v490, 1.442695
  %v492 = vpow.pop %v491
  %v493 = vadd.f32 %v492, 1.0
  %v494 = vrcp.pop %v493
  %v495 = vmul.f32 1.0, %v494
  %v496 = vsel %vm130, %v489, %v495
  %v498 = vrot.slane %v416, 6
  %v500 = vmul.f32 %v488, %v498
  %v501 = vmul.f32 %v488, %v496
  %503 = vrot.lane.b32.xlu0 %v501, 64
  %v504 = vpop.permute.xlu0 %503
  %v506 = vadd.f32 %v500, %v504
  %v507 = vtanh.pop %v506
  %v508 = vmul.f32 %v496, %v507
  %510 = vrot.lane.b32.xlu0 %v508, 64
  %v511 = vpop.permute.xlu0 %510
  %s513 = scalar_lea.vmem [#allocation2], 6
  %vm514 = vcmask 523270
  %515 = vst.msk [vmem:[%s513 - $0x6] sm:$0xc0] %vm514, %v511
  %v516 = vpack.c.bf16 %v508, %v508
  %v518 = vrot.slane %v516, 3
  %519 = vrot.lane.b32.xlu0 %v518, 64
  %v520 = vpop.permute.xlu0 %519
  %v522 = vsel %vm171, %v520, 0
  %524 = vmatprep.subr.bf16.mxu0 0
  %525 = vmatpush1.bf16.msra.mxu0 0
  %526 = vmatprep.subr.bf16.mxu0 0
  %527 = vmatpush1.bf16.msra.mxu0 0
  %528 = vmatprep.subr.bf16.mxu0 0
  %529 = vmatpush1.bf16.msra.mxu0 0
  %530 = vmatprep.subr.bf16.mxu0 0
  %531 = vmatpush1.bf16.msra.mxu0 0
  %532 = vmatprep.subr.bf16.mxu0 %v162
  %533 = vmatpush1.bf16.msra.mxu0 %v161
  %534 = vmatprep.subr.bf16.mxu0 %v160
  %535 = vmatpush1.bf16.msra.mxu0 %v159
  %536 = vmatprep.subr.bf16.mxu0 %v158
  %537 = vmatpush1.bf16.msra.mxu0 %v157
  %538 = vmatprep.subr.bf16.mxu0 %v156
  %539 = vmatpush1.bf16.msra.mxu0 %v155
  %540 = vmatprep.subr.bf16.mxu0 0
  %541 = vmatpush2.bf16.msra.mxu0 0
  %542 = vmatprep.subr.bf16.mxu0 0
  %543 = vmatpush2.bf16.msra.mxu0 0
  %544 = vmatprep.subr.bf16.mxu0 0
  %545 = vmatpush2.bf16.msra.mxu0 0
  %546 = vmatprep.subr.bf16.mxu0 0
  %547 = vmatpush2.bf16.msra.mxu0 0
  %548 = vmatprep.subr.bf16.mxu0 0
  %549 = vmatpush2.bf16.msra.mxu0 0
  %550 = vmatprep.subr.bf16.mxu0 0
  %551 = vmatpush2.bf16.msra.mxu0 0
  %552 = vmatprep.subr.bf16.mxu0 0
  %553 = vmatpush2.bf16.msra.mxu0 0
  %554 = vmatprep.subr.bf16.mxu0 0
  %555 = vmatpush2.bf16.msra.mxu0 0
  %556 = vmatprep.mubr.bf16.mxu0 0
  %557 = vmatmul.mubr.bf16.gmra.mxu0 %v522
  %v558 = vpop.f32.mrf.mxu0
  %v559 = vadd.f32 0.0, %v558
  %v560 = vpop.f32.mrf.mxu0
  %v561 = vadd.f32 0.0, %v560
  %v562 = vpop.f32.mrf.mxu0
  %v563 = vpop.f32.mrf.mxu0
  %564 = vdwg.mxu0
  %v565 = vadd.f32 %v116, %v559
  %v566 = vadd.f32 %v118, %v561
  %v567 = vxor.u32 %v565, 2147483648
  %v568 = vmul.f32 %v567, 1.442695
  %v569 = vpow.pop %v568
  %v570 = vadd.f32 %v569, 1.0
  %v571 = vrcp.pop %v570
  %v572 = vmul.f32 1.0, %v571
  %v573 = vtanh.pop %v566
  %v574 = vxor.u32 %v566, 2147483648
  %v575 = vmul.f32 %v574, 1.442695
  %v576 = vpow.pop %v575
  %v577 = vadd.f32 %v576, 1.0
  %v578 = vrcp.pop %v577
  %v579 = vmul.f32 1.0, %v578
  %v580 = vsel %vm130, %v573, %v579
  %v582 = vrot.slane %v506, 6
  %v584 = vmul.f32 %v572, %v582
  %v585 = vmul.f32 %v572, %v580
  %587 = vrot.lane.b32.xlu0 %v585, 64
  %v588 = vpop.permute.xlu0 %587
  %v590 = vadd.f32 %v584, %v588
  %v591 = vtanh.pop %v590
  %v592 = vmul.f32 %v580, %v591
  %594 = vrot.lane.b32.xlu0 %v592, 64
  %v595 = vpop.permute.xlu0 %594
  %s597 = scalar_lea.vmem [#allocation2], 8
  %598 = vst.msk [vmem:[%s597] sm:$0x3] %vm245, %v595
  %v599 = vpack.c.bf16 %v592, %v592
  %601 = vrot.lane.b32.xlu0 %v599, 64
  %v602 = vpop.permute.xlu0 %601
  %v604 = vsel %vm171, %v602, 0
  %606 = vmatprep.subr.bf16.mxu0 0
  %607 = vmatpush1.bf16.msra.mxu0 0
  %608 = vmatprep.subr.bf16.mxu0 0
  %609 = vmatpush1.bf16.msra.mxu0 0
  %610 = vmatprep.subr.bf16.mxu0 0
  %611 = vmatpush1.bf16.msra.mxu0 0
  %612 = vmatprep.subr.bf16.mxu0 0
  %613 = vmatpush1.bf16.msra.mxu0 0
  %614 = vmatprep.subr.bf16.mxu0 %v162
  %615 = vmatpush1.bf16.msra.mxu0 %v161
  %616 = vmatprep.subr.bf16.mxu0 %v160
  %617 = vmatpush1.bf16.msra.mxu0 %v159
  %618 = vmatprep.subr.bf16.mxu0 %v158
  %619 = vmatpush1.bf16.msra.mxu0 %v157
  %620 = vmatprep.subr.bf16.mxu0 %v156
  %621 = vmatpush1.bf16.msra.mxu0 %v155
  %622 = vmatprep.subr.bf16.mxu0 0
  %623 = vmatpush2.bf16.msra.mxu0 0
  %624 = vmatprep.subr.bf16.mxu0 0
  %625 = vmatpush2.bf16.msra.mxu0 0
  %626 = vmatprep.subr.bf16.mxu0 0
  %627 = vmatpush2.bf16.msra.mxu0 0
  %628 = vmatprep.subr.bf16.mxu0 0
  %629 = vmatpush2.bf16.msra.mxu0 0
  %630 = vmatprep.subr.bf16.mxu0 0
  %631 = vmatpush2.bf16.msra.mxu0 0
  %632 = vmatprep.subr.bf16.mxu0 0
  %633 = vmatpush2.bf16.msra.mxu0 0
  %634 = vmatprep.subr.bf16.mxu0 0
  %635 = vmatpush2.bf16.msra.mxu0 0
  %636 = vmatprep.subr.bf16.mxu0 0
  %637 = vmatpush2.bf16.msra.mxu0 0
  %638 = vmatprep.mubr.bf16.mxu0 0
  %639 = vmatmul.mubr.bf16.gmra.mxu0 %v604
  %v640 = vpop.f32.mrf.mxu0
  %v641 = vadd.f32 0.0, %v640
  %v642 = vpop.f32.mrf.mxu0
  %v643 = vadd.f32 0.0, %v642
  %v644 = vpop.f32.mrf.mxu0
  %v645 = vpop.f32.mrf.mxu0
  %646 = vdwg.mxu0
  %v649 = vrot.slane %v641, 6
  %v650 = vrot.slane %v643, 6
  %v653 = vadd.f32 %v116, %v649
  %v654 = vadd.f32 %v118, %v650
  %v655 = vxor.u32 %v653, 2147483648
  %v656 = vmul.f32 %v655, 1.442695
  %v657 = vpow.pop %v656
  %v658 = vadd.f32 %v657, 1.0
  %v659 = vrcp.pop %v658
  %v660 = vmul.f32 1.0, %v659
  %v661 = vtanh.pop %v654
  %v662 = vxor.u32 %v654, 2147483648
  %v663 = vmul.f32 %v662, 1.442695
  %v664 = vpow.pop %v663
  %v665 = vadd.f32 %v664, 1.0
  %v666 = vrcp.pop %v665
  %v667 = vmul.f32 1.0, %v666
  %v668 = vsel %vm130, %v661, %v667
  %v670 = vrot.slane %v590, 6
  %v672 = vmul.f32 %v660, %v670
  %v673 = vmul.f32 %v660, %v668
  %675 = vrot.lane.b32.xlu0 %v673, 64
  %v676 = vpop.permute.xlu0 %675
  %v678 = vadd.f32 %v672, %v676
  %v679 = vtanh.pop %v678
  %v680 = vmul.f32 %v668, %v679
  %682 = vrot.lane.b32.xlu0 %v680, 64
  %v683 = vpop.permute.xlu0 %682
  %s685 = scalar_lea.vmem [#allocation2], 10
  %686 = vst.msk [vmem:[%s685 - $0x2] sm:$0xc] %vm334, %v683
  %v687 = vpack.c.bf16 %v680, %v680
  %v689 = vrot.slane %v687, 1
  %690 = vrot.lane.b32.xlu0 %v689, 64
  %v691 = vpop.permute.xlu0 %690
  %v693 = vsel %vm171, %v691, 0
  %695 = vmatprep.subr.bf16.mxu0 0
  %696 = vmatpush1.bf16.msra.mxu0 0
  %697 = vmatprep.subr.bf16.mxu0 0
  %698 = vmatpush1.bf16.msra.mxu0 0
  %699 = vmatprep.subr.bf16.mxu0 0
  %700 = vmatpush1.bf16.msra.mxu0 0
  %701 = vmatprep.subr.bf16.mxu0 0
  %702 = vmatpush1.bf16.msra.mxu0 0
  %703 = vmatprep.subr.bf16.mxu0 %v162
  %704 = vmatpush1.bf16.msra.mxu0 %v161
  %705 = vmatprep.subr.bf16.mxu0 %v160
  %706 = vmatpush1.bf16.msra.mxu0 %v159
  %707 = vmatprep.subr.bf16.mxu0 %v158
  %708 = vmatpush1.bf16.msra.mxu0 %v157
  %709 = vmatprep.subr.bf16.mxu0 %v156
  %710 = vmatpush1.bf16.msra.mxu0 %v155
  %711 = vmatprep.subr.bf16.mxu0 0
  %712 = vmatpush2.bf16.msra.mxu0 0
  %713 = vmatprep.subr.bf16.mxu0 0
  %714 = vmatpush2.bf16.msra.mxu0 0
  %715 = vmatprep.subr.bf16.mxu0 0
  %716 = vmatpush2.bf16.msra.mxu0 0
  %717 = vmatprep.subr.bf16.mxu0 0
  %718 = vmatpush2.bf16.msra.mxu0 0
  %719 = vmatprep.subr.bf16.mxu0 0
  %720 = vmatpush2.bf16.msra.mxu0 0
  %721 = vmatprep.subr.bf16.mxu0 0
  %722 = vmatpush2.bf16.msra.mxu0 0
  %723 = vmatprep.subr.bf16.mxu0 0
  %724 = vmatpush2.bf16.msra.mxu0 0
  %725 = vmatprep.subr.bf16.mxu0 0
  %726 = vmatpush2.bf16.msra.mxu0 0
  %727 = vmatprep.mubr.bf16.mxu0 0
  %728 = vmatmul.mubr.bf16.gmra.mxu0 %v693
  %v729 = vpop.f32.mrf.mxu0
  %v730 = vadd.f32 0.0, %v729
  %v731 = vpop.f32.mrf.mxu0
  %v732 = vadd.f32 0.0, %v731
  %v733 = vpop.f32.mrf.mxu0
  %v734 = vpop.f32.mrf.mxu0
  %735 = vdwg.mxu0
  %v738 = vrot.slane %v730, 4
  %v739 = vrot.slane %v732, 4
  %v742 = vadd.f32 %v116, %v738
  %v743 = vadd.f32 %v118, %v739
  %v744 = vxor.u32 %v742, 2147483648
  %v745 = vmul.f32 %v744, 1.442695
  %v746 = vpow.pop %v745
  %v747 = vadd.f32 %v746, 1.0
  %v748 = vrcp.pop %v747
  %v749 = vmul.f32 1.0, %v748
  %v750 = vtanh.pop %v743
  %v751 = vxor.u32 %v743, 2147483648
  %v752 = vmul.f32 %v751, 1.442695
  %v753 = vpow.pop %v752
  %v754 = vadd.f32 %v753, 1.0
  %v755 = vrcp.pop %v754
  %v756 = vmul.f32 1.0, %v755
  %v757 = vsel %vm130, %v750, %v756
  %v759 = vrot.slane %v678, 6
  %v761 = vmul.f32 %v749, %v759
  %v762 = vmul.f32 %v749, %v757
  %764 = vrot.lane.b32.xlu0 %v762, 64
  %v765 = vpop.permute.xlu0 %764
  %v767 = vadd.f32 %v761, %v765
  %v768 = vtanh.pop %v767
  %v769 = vmul.f32 %v757, %v768
  %771 = vrot.lane.b32.xlu0 %v769, 64
  %v772 = vpop.permute.xlu0 %771
  %s774 = scalar_lea.vmem [#allocation2], 12
  %775 = vst.msk [vmem:[%s774 - $0x4] sm:$0x30] %vm424, %v772
  %v776 = vpack.c.bf16 %v769, %v769
  %v778 = vrot.slane %v776, 2
  %779 = vrot.lane.b32.xlu0 %v778, 64
  %v780 = vpop.permute.xlu0 %779
  %v782 = vsel %vm171, %v780, 0
  %784 = vmatprep.subr.bf16.mxu0 0
  %785 = vmatpush1.bf16.msra.mxu0 0
  %786 = vmatprep.subr.bf16.mxu0 0
  %787 = vmatpush1.bf16.msra.mxu0 0
  %788 = vmatprep.subr.bf16.mxu0 0
  %789 = vmatpush1.bf16.msra.mxu0 0
  %790 = vmatprep.subr.bf16.mxu0 0
  %791 = vmatpush1.bf16.msra.mxu0 0
  %792 = vmatprep.subr.bf16.mxu0 %v162
  %793 = vmatpush1.bf16.msra.mxu0 %v161
  %794 = vmatprep.subr.bf16.mxu0 %v160
  %795 = vmatpush1.bf16.msra.mxu0 %v159
  %796 = vmatprep.subr.bf16.mxu0 %v158
  %797 = vmatpush1.bf16.msra.mxu0 %v157
  %798 = vmatprep.subr.bf16.mxu0 %v156
  %799 = vmatpush1.bf16.msra.mxu0 %v155
  %800 = vmatprep.subr.bf16.mxu0 0
  %801 = vmatpush2.bf16.msra.mxu0 0
  %802 = vmatprep.subr.bf16.mxu0 0
  %803 = vmatpush2.bf16.msra.mxu0 0
  %804 = vmatprep.subr.bf16.mxu0 0
  %805 = vmatpush2.bf16.msra.mxu0 0
  %806 = vmatprep.subr.bf16.mxu0 0
  %807 = vmatpush2.bf16.msra.mxu0 0
  %808 = vmatprep.subr.bf16.mxu0 0
  %809 = vmatpush2.bf16.msra.mxu0 0
  %810 = vmatprep.subr.bf16.mxu0 0
  %811 = vmatpush2.bf16.msra.mxu0 0
  %812 = vmatprep.subr.bf16.mxu0 0
  %813 = vmatpush2.bf16.msra.mxu0 0
  %814 = vmatprep.subr.bf16.mxu0 0
  %815 = vmatpush2.bf16.msra.mxu0 0
  %816 = vmatprep.mubr.bf16.mxu0 0
  %817 = vmatmul.mubr.bf16.gmra.mxu0 %v782
  %v818 = vpop.f32.mrf.mxu0
  %v819 = vadd.f32 0.0, %v818
  %v820 = vpop.f32.mrf.mxu0
  %v821 = vadd.f32 0.0, %v820
  %v822 = vpop.f32.mrf.mxu0
  %v823 = vpop.f32.mrf.mxu0
  %824 = vdwg.mxu0
  %v827 = vrot.slane %v819, 2
  %v828 = vrot.slane %v821, 2
  %v831 = vadd.f32 %v116, %v827
  %v832 = vadd.f32 %v118, %v828
  %v833 = vxor.u32 %v831, 2147483648
  %v834 = vmul.f32 %v833, 1.442695
  %v835 = vpow.pop %v834
  %v836 = vadd.f32 %v835, 1.0
  %v837 = vrcp.pop %v836
  %v838 = vmul.f32 1.0, %v837
  %v839 = vtanh.pop %v832
  %v840 = vxor.u32 %v832, 2147483648
  %v841 = vmul.f32 %v840, 1.442695
  %v842 = vpow.pop %v841
  %v843 = vadd.f32 %v842, 1.0
  %v844 = vrcp.pop %v843
  %v845 = vmul.f32 1.0, %v844
  %v846 = vsel %vm130, %v839, %v845
  %v848 = vrot.slane %v767, 6
  %v850 = vmul.f32 %v838, %v848
  %v851 = vmul.f32 %v838, %v846
  %853 = vrot.lane.b32.xlu0 %v851, 64
  %v854 = vpop.permute.xlu0 %853
  %v856 = vadd.f32 %v850, %v854
  %v857 = vtanh.pop %v856
  %v858 = vmul.f32 %v846, %v857
  %860 = vrot.lane.b32.xlu0 %v858, 64
  %v861 = vpop.permute.xlu0 %860
  %s863 = scalar_lea.vmem [#allocation2], 14
  %864 = vst.msk [vmem:[%s863 - $0x6] sm:$0xc0] %vm514, %v861
  %s865 = sld [smem:[#allocation5]]
  %s866 = sld [smem:[#allocation4 + $0x1]]
  %s867 = sld [smem:[#allocation4]]
  %p868 = scmp.gt.s32.totalorder %s866, 0
  %s869 = scalar_select %p868, %s866, 0
  %p870 = scmp.lt.s32.totalorder %s869, 7
  %s871 = scalar_select %p870, %s869, 7
  %s872 = ssub.s32 %s865, 1
  %s873 = ssub.s32 %s872, %s867
  %p874 = scmp.gt.s32.totalorder %s873, 0
  %s875 = scalar_select %p874, %s873, 0
  %p876 = scmp.lt.s32.totalorder %s875, 7
  %s877 = scalar_select %p876, %s875, 7
  %s878 = smul.u32 %s871, 2
  %s879 = scalar_lea.vmem [#allocation2], %s878
  %v880 = vld [vmem:[%s879] sm:$0x3]
  %s881 = smul.u32 %s877, 2
  %s882 = scalar_lea.vmem [#allocation2], %s881
  %v883 = vld [vmem:[%s882] sm:$0x3]
  %p884 = scmp.lt.s32.totalorder %s866, %s865
  %s885 = scalar_select %p884, 1, 0
  %s886 = scvt.s32.f32 %s885
  %v887 = vstv %s886
  %v888 = vmul.f32 %v880, %v887
  %p889 = scmp.lt.s32.totalorder %s867, %s865
  %s890 = scalar_select %p889, 1, 0
  %s891 = scvt.s32.f32 %s890
  %v892 = vstv %s891
  %v893 = vmul.f32 %v883, %v892
  %vm894 = vcmask 261120
  %v895 = vsel %vm894, %v888, %v893
  %s896 = sld [smem:[#allocation4 + $0x2]]
  %p897 = scmp.gt.s32.totalorder %s896, 0
  %s898 = scalar_select %p897, %s896, 0
  %p899 = scmp.lt.s32.totalorder %s898, 7
  %s900 = scalar_select %p899, %s898, 7
  %s901 = ssub.s32 %s872, %s866
  %p902 = scmp.gt.s32.totalorder %s901, 0
  %s903 = scalar_select %p902, %s901, 0
  %p904 = scmp.lt.s32.totalorder %s903, 7
  %s905 = scalar_select %p904, %s903, 7
  %s906 = smul.u32 %s900, 2
  %s907 = scalar_lea.vmem [#allocation2], %s906
  %v908 = vld [vmem:[%s907] sm:$0x3]
  %s909 = smul.u32 %s905, 2
  %s910 = scalar_lea.vmem [#allocation2], %s909
  %v911 = vld [vmem:[%s910] sm:$0x3]
  %p912 = scmp.lt.s32.totalorder %s896, %s865
  %s913 = scalar_select %p912, 1, 0
  %s914 = scvt.s32.f32 %s913
  %v915 = vstv %s914
  %v916 = vmul.f32 %v908, %v915
  %v917 = vmul.f32 %v911, %v887
  %v918 = vsel %vm894, %v916, %v917
  %s919 = sld [smem:[#allocation4 + $0x3]]
  %p920 = scmp.gt.s32.totalorder %s919, 0
  %s921 = scalar_select %p920, %s919, 0
  %p922 = scmp.lt.s32.totalorder %s921, 7
  %s923 = scalar_select %p922, %s921, 7
  %s924 = ssub.s32 %s872, %s896
  %p925 = scmp.gt.s32.totalorder %s924, 0
  %s926 = scalar_select %p925, %s924, 0
  %p927 = scmp.lt.s32.totalorder %s926, 7
  %s928 = scalar_select %p927, %s926, 7
  %s929 = smul.u32 %s923, 2
  %s930 = scalar_lea.vmem [#allocation2], %s929
  %v931 = vld [vmem:[%s930] sm:$0x3]
  %s932 = smul.u32 %s928, 2
  %s933 = scalar_lea.vmem [#allocation2], %s932
  %v934 = vld [vmem:[%s933] sm:$0x3]
  %p935 = scmp.lt.s32.totalorder %s919, %s865
  %s936 = scalar_select %p935, 1, 0
  %s937 = scvt.s32.f32 %s936
  %v938 = vstv %s937
  %v939 = vmul.f32 %v931, %v938
  %v940 = vmul.f32 %v934, %v915
  %v941 = vsel %vm894, %v939, %v940
  %s942 = sld [smem:[#allocation5 + $0x1]]
  %s943 = sld [smem:[#allocation4 + $0x81]]
  %s944 = sld [smem:[#allocation4 + $0x80]]
  %p945 = scmp.gt.s32.totalorder %s943, 0
  %s946 = scalar_select %p945, %s943, 0
  %p947 = scmp.lt.s32.totalorder %s946, 7
  %s948 = scalar_select %p947, %s946, 7
  %s949 = ssub.s32 %s942, 1
  %s950 = ssub.s32 %s949, %s944
  %p951 = scmp.gt.s32.totalorder %s950, 0
  %s952 = scalar_select %p951, %s950, 0
  %p953 = scmp.lt.s32.totalorder %s952, 7
  %s954 = scalar_select %p953, %s952, 7
  %s955 = smul.u32 %s948, 2
  %s956 = scalar_lea.vmem [#allocation2], %s955
  %v957 = vld [vmem:[%s956] sm:$0x3]
  %s958 = smul.u32 %s954, 2
  %s959 = scalar_lea.vmem [#allocation2], %s958
  %v960 = vld [vmem:[%s959] sm:$0x3]
  %p961 = scmp.lt.s32.totalorder %s943, %s942
  %s962 = scalar_select %p961, 1, 0
  %s963 = scvt.s32.f32 %s962
  %v964 = vstv %s963
  %v965 = vmul.f32 %v957, %v964
  %p966 = scmp.lt.s32.totalorder %s944, %s942
  %s967 = scalar_select %p966, 1, 0
  %s968 = scvt.s32.f32 %s967
  %v969 = vstv %s968
  %v970 = vmul.f32 %v960, %v969
  %v971 = vsel %vm894, %v965, %v970
  %s972 = sld [smem:[#allocation4 + $0x82]]
  %p973 = scmp.gt.s32.totalorder %s972, 0
  %s974 = scalar_select %p973, %s972, 0
  %p975 = scmp.lt.s32.totalorder %s974, 7
  %s976 = scalar_select %p975, %s974, 7
  %s977 = ssub.s32 %s949, %s943
  %p978 = scmp.gt.s32.totalorder %s977, 0
  %s979 = scalar_select %p978, %s977, 0
  %p980 = scmp.lt.s32.totalorder %s979, 7
  %s981 = scalar_select %p980, %s979, 7
  %s982 = smul.u32 %s976, 2
  %s983 = scalar_lea.vmem [#allocation2], %s982
  %v984 = vld [vmem:[%s983] sm:$0x3]
  %s985 = smul.u32 %s981, 2
  %s986 = scalar_lea.vmem [#allocation2], %s985
  %v987 = vld [vmem:[%s986] sm:$0x3]
  %p988 = scmp.lt.s32.totalorder %s972, %s942
  %s989 = scalar_select %p988, 1, 0
  %s990 = scvt.s32.f32 %s989
  %v991 = vstv %s990
  %v992 = vmul.f32 %v984, %v991
  %v993 = vmul.f32 %v987, %v964
  %v994 = vsel %vm894, %v992, %v993
  %s995 = sld [smem:[#allocation4 + $0x83]]
  %p996 = scmp.gt.s32.totalorder %s995, 0
  %s997 = scalar_select %p996, %s995, 0
  %p998 = scmp.lt.s32.totalorder %s997, 7
  %s999 = scalar_select %p998, %s997, 7
  %s1000 = ssub.s32 %s949, %s972
  %p1001 = scmp.gt.s32.totalorder %s1000, 0
  %s1002 = scalar_select %p1001, %s1000, 0
  %p1003 = scmp.lt.s32.totalorder %s1002, 7
  %s1004 = scalar_select %p1003, %s1002, 7
  %s1005 = smul.u32 %s999, 2
  %s1006 = scalar_lea.vmem [#allocation2], %s1005
  %v1007 = vld [vmem:[%s1006] sm:$0x3]
  %s1008 = smul.u32 %s1004, 2
  %s1009 = scalar_lea.vmem [#allocation2], %s1008
  %v1010 = vld [vmem:[%s1009] sm:$0x3]
  %p1011 = scmp.lt.s32.totalorder %s995, %s942
  %s1012 = scalar_select %p1011, 1, 0
  %s1013 = scvt.s32.f32 %s1012
  %v1014 = vstv %s1013
  %v1015 = vmul.f32 %v1007, %v1014
  %v1016 = vmul.f32 %v1010, %v991
  %v1017 = vsel %vm894, %v1015, %v1016
  %v1019 = vrot.slane %v918, 7
  %v1022 = vrot.slane %v941, 6
  %v1025 = vrot.slane %v971, 6
  %v1028 = vrot.slane %v994, 5
  %v1031 = vrot.slane %v1017, 4
  %vm1033 = vcmask 1040384
  %v1034 = vsel %vm1033, %v895, %v1019
  %vm1035 = vcmask 1041408
  %v1036 = vsel %vm1035, %v1034, %v1022
  %vm1037 = vcmask 1042432
  %v1038 = vsel %vm1037, %v1036, %v1025
  %vm1039 = vcmask 1043456
  %v1040 = vsel %vm1039, %v1038, %v1028
  %vm1041 = vcmask 1044480
  %v1042 = vsel %vm1041, %v1040, %v1031
  %vm1043 = vcmask 1045504
  %v1044 = vsel %vm1043, %v1042, 0.0
  %v1045 = vpack.c.bf16 %v1044, %v1044
  %v1046 = vld [vmem:[%s6] sm:$0xf]
  %v1047 = vld [vmem:[%s6 + $0x4] sm:$0xf]
  %v1048 = vld [vmem:[%s6 + $0x8] sm:$0xf]
  %v1049 = vld [vmem:[%s6 + $0xc] sm:$0xf]
  %v1050 = vld [vmem:[%s6 + $0x10] sm:$0xf]
  %v1051 = vld [vmem:[%s6 + $0x14] sm:$0xf]
  %v1052 = vld [vmem:[%s6 + $0x18] sm:$0xf]
  %v1053 = vld [vmem:[%s6 + $0x1c] sm:$0xf]
  %v1054 = vld [vmem:[%s7] sm:$0x1]
  %v1056 = vlaneseq
  %v1057 = vshrl.u32 %v1056, 7
  %v1058 = vsub.s32 0, %v1057
  %v1059 = vrot.slane %v1054, %v1058
  %v1069 = vunpack.c.l.b16 %v1046
  %v1070 = vunpack.c.l.b16 %v1047
  %v1071 = vunpack.c.l.b16 %v1048
  %v1072 = vunpack.c.l.b16 %v1049
  %v1073 = vunpack.c.l.b16 %v1050
  %v1074 = vunpack.c.l.b16 %v1051
  %v1075 = vunpack.c.l.b16 %v1052
  %v1076 = vunpack.c.l.b16 %v1053
  %v1077 = vpack.c.b16 %v1070, %v1069
  %v1078 = vpack.c.b16 %v1072, %v1071
  %v1079 = vpack.c.b16 %v1074, %v1073
  %v1080 = vpack.c.b16 %v1076, %v1075
  %v1086 = vsel %vm171, %v1045, 0
  %1088 = vmatprep.subr.bf16.mxu0 0
  %1089 = vmatpush1.bf16.msra.mxu0 0
  %1090 = vmatprep.subr.bf16.mxu0 0
  %1091 = vmatpush1.bf16.msra.mxu0 0
  %1092 = vmatprep.subr.bf16.mxu0 0
  %1093 = vmatpush1.bf16.msra.mxu0 0
  %1094 = vmatprep.subr.bf16.mxu0 0
  %1095 = vmatpush1.bf16.msra.mxu0 0
  %1096 = vmatprep.subr.bf16.mxu0 0
  %1097 = vmatpush1.bf16.msra.mxu0 %v1080
  %1098 = vmatprep.subr.bf16.mxu0 0
  %1099 = vmatpush1.bf16.msra.mxu0 %v1079
  %1100 = vmatprep.subr.bf16.mxu0 0
  %1101 = vmatpush1.bf16.msra.mxu0 %v1078
  %1102 = vmatprep.subr.bf16.mxu0 0
  %1103 = vmatpush1.bf16.msra.mxu0 %v1077
  %1104 = vmatprep.subr.bf16.mxu0 0
  %1105 = vmatpush2.bf16.msra.mxu0 0
  %1106 = vmatprep.subr.bf16.mxu0 0
  %1107 = vmatpush2.bf16.msra.mxu0 0
  %1108 = vmatprep.subr.bf16.mxu0 0
  %1109 = vmatpush2.bf16.msra.mxu0 0
  %1110 = vmatprep.subr.bf16.mxu0 0
  %1111 = vmatpush2.bf16.msra.mxu0 0
  %1112 = vmatprep.subr.bf16.mxu0 0
  %1113 = vmatpush2.bf16.msra.mxu0 0
  %1114 = vmatprep.subr.bf16.mxu0 0
  %1115 = vmatpush2.bf16.msra.mxu0 0
  %1116 = vmatprep.subr.bf16.mxu0 0
  %1117 = vmatpush2.bf16.msra.mxu0 0
  %1118 = vmatprep.subr.bf16.mxu0 0
  %1119 = vmatpush2.bf16.msra.mxu0 0
  %1120 = vmatprep.mubr.bf16.mxu0 0
  %1121 = vmatmul.mubr.bf16.gmra.mxu0 %v1086
  %v1122 = vpop.f32.mrf.mxu0
  %v1123 = vadd.f32 %v1059, %v1122
  %v1124 = vpop.f32.mrf.mxu0
  %v1125 = vpop.f32.mrf.mxu0
  %v1126 = vpop.f32.mrf.mxu0
  %1127 = vdwg.mxu0
  %v1128 = vmax.f32 %v1123, 0.0
  %v1129 = vpack.c.bf16 %v1128, %v1128
  %v1130 = vld [vmem:[%s8] sm:$0xf]
  %v1131 = vld [vmem:[%s8 + $0x4] sm:$0xf]
  %v1132 = vld [vmem:[%s8 + $0x8] sm:$0xf]
  %v1133 = vld [vmem:[%s8 + $0xc] sm:$0xf]
  %v1134 = vld [vmem:[%s9] sm:$0x1]
  %v1136 = vlaneseq
  %v1137 = vshrl.u32 %v1136, 7
  %v1138 = vsub.s32 0, %v1137
  %v1139 = vrot.slane %v1134, %v1138
  %v1145 = vunpack.c.l.b16 %v1130
  %v1146 = vunpack.c.l.b16 %v1131
  %v1147 = vunpack.c.l.b16 %v1132
  %v1148 = vunpack.c.l.b16 %v1133
  %v1149 = vpack.c.b16 %v1146, %v1145
  %v1150 = vpack.c.b16 %v1148, %v1147
  %v1154 = vsel %vm894, %v1129, 0
  %1156 = vmatprep.subr.bf16.mxu0 0
  %1157 = vmatpush1.bf16.msra.mxu0 0
  %1158 = vmatprep.subr.bf16.mxu0 0
  %1159 = vmatpush1.bf16.msra.mxu0 0
  %1160 = vmatprep.subr.bf16.mxu0 0
  %1161 = vmatpush1.bf16.msra.mxu0 0
  %1162 = vmatprep.subr.bf16.mxu0 0
  %1163 = vmatpush1.bf16.msra.mxu0 0
  %1164 = vmatprep.subr.bf16.mxu0 0
  %1165 = vmatpush1.bf16.msra.mxu0 0
  %1166 = vmatprep.subr.bf16.mxu0 0
  %1167 = vmatpush1.bf16.msra.mxu0 0
  %1168 = vmatprep.subr.bf16.mxu0 0
  %1169 = vmatpush1.bf16.msra.mxu0 %v1150
  %1170 = vmatprep.subr.bf16.mxu0 0
  %1171 = vmatpush1.bf16.msra.mxu0 %v1149
  %1172 = vmatprep.subr.bf16.mxu0 0
  %1173 = vmatpush2.bf16.msra.mxu0 0
  %1174 = vmatprep.subr.bf16.mxu0 0
  %1175 = vmatpush2.bf16.msra.mxu0 0
  %1176 = vmatprep.subr.bf16.mxu0 0
  %1177 = vmatpush2.bf16.msra.mxu0 0
  %1178 = vmatprep.subr.bf16.mxu0 0
  %1179 = vmatpush2.bf16.msra.mxu0 0
  %1180 = vmatprep.subr.bf16.mxu0 0
  %1181 = vmatpush2.bf16.msra.mxu0 0
  %1182 = vmatprep.subr.bf16.mxu0 0
  %1183 = vmatpush2.bf16.msra.mxu0 0
  %1184 = vmatprep.subr.bf16.mxu0 0
  %1185 = vmatpush2.bf16.msra.mxu0 0
  %1186 = vmatprep.subr.bf16.mxu0 0
  %1187 = vmatpush2.bf16.msra.mxu0 0
  %1188 = vmatprep.mubr.bf16.mxu0 0
  %1189 = vmatmul.mubr.bf16.gmra.mxu0 %v1154
  %v1190 = vpop.f32.mrf.mxu0
  %v1191 = vadd.f32 %v1139, %v1190
  %v1192 = vpop.f32.mrf.mxu0
  %v1193 = vpop.f32.mrf.mxu0
  %v1194 = vpop.f32.mrf.mxu0
  %1195 = vdwg.mxu0
  %vm1196 = vcmask 64512
  %v1197 = vsel %vm1196, %v1191, 0.0
  %1198 = vst [vmem:[%s10] sm:$0xff] %v1197
  // Predicated region
  $region34: #{character_level_network_forward.1} parent=0 // pred_check
    _
  $region35: #{character_level_network_forward.1} parent=0 // pred_check_branch
    %1200 = sbr.rel (0) target = $region37
  $region36: #{character_level_network_forward.1} parent=0 // pred_region
    _
  $region37: #{character_level_network_forward.1} parent=0 // pred_fallthru
    _
  // Predicated region
  $region38: #{character_level_network_forward.1} parent=0 // pred_check
    _
  $region39: #{character_level_network_forward.1} parent=0 // pred_check_branch
    %1202 = sbr.rel (0) target = $region41
  $region40: #{character_level_network_forward.1} parent=0 // pred_region
    _
  $region41: #{character_level_network_forward.1} parent=0 // pred_fallthru
    _

</llo_original>
